<compile_context>
chip_gen: v7x
topology: tpu7x:2x2x1
jax: 0.10.0
libtpu: 0.0.40
codegen_flags: <defaults>
</compile_context>

<pallas_src>
import functools
import math

import jax
import jax.numpy as jnp
from jax.experimental import pallas as pl
from jax.experimental.pallas import tpu as pltpu

_LANE = 128


def _round_up(n, m):
    return ((n + m - 1) // m) * m


# ----------------------------------------------------------------------------
# Kernel
# ----------------------------------------------------------------------------
def _generator_kernel(n_hidden, *refs):
    """Fused MLP forward for one batch tile.

    refs = [x,
            (w_folded_bf16, shift_folded_f32) * n_hidden,
            w_out_bf16, b_out_f32,
            out]
    Weight / shift refs are whole-array VMEM resident (constant index_map);
    x / out are (block_batch, features) tiles.
    """
    x_ref = refs[0]
    out_ref = refs[-1]
    params = refs[1:-1]

    h = x_ref[...]                                # f32 activations
    idx = 0
    for _ in range(n_hidden):
        w = params[idx][...]                      # bf16 folded weight
        shift = params[idx + 1][...]              # f32 folded bias/BN shift
        idx += 2
        # Linear + folded BatchNorm: bf16 MXU operands, f32 accumulation.
        h = jnp.dot(h.astype(jnp.bfloat16), w,
                    preferred_element_type=jnp.float32) + shift
        # LeakyReLU(0.2)
        h = jnp.maximum(h, 0.2 * h)
        # Dropout: identity in eval mode

    w_out = params[idx][...]
    b_out = params[idx + 1][...]
    y = jnp.dot(h.astype(jnp.bfloat16), w_out,
                preferred_element_type=jnp.float32) + b_out
    out_ref[...] = jnp.tanh(y)


# ----------------------------------------------------------------------------
# Wrapper
# ----------------------------------------------------------------------------
@functools.partial(jax.jit, static_argnames=("output_dim", "block_batch_cap"))
def threat_generator_forward(noise, kernel_params, *, output_dim, block_batch_cap=1024):
    """kernel_params: (hidden_layers, (w_out_p, b_out_p)) with folded bf16 weights."""
    hidden_layers, (w_out, b_out) = kernel_params
    n_hidden = len(hidden_layers)

    batch, noise_dim = noise.shape
    out_pad = w_out.shape[1]

    # Adaptive batch tile: big enough to amortize per-step overhead, >=2 grid steps
    # when the batch allows it (v7x dual-TC), never wildly over-padding small batches.
    block_batch = max(128, min(block_batch_cap, _round_up(pl.cdiv(batch, 2), 128)))

    pb = _round_up(batch, block_batch)
    if pb != batch:
        noise = jnp.pad(noise, ((0, pb - batch), (0, 0)))

    flat = []
    for (w, s) in hidden_layers:
        flat.extend([w, s])
    flat.extend([w_out, b_out])

    const_map = lambda i: (0, 0)
    in_specs = [pl.BlockSpec((block_batch, noise_dim), lambda i: (i, 0))]
    in_specs += [pl.BlockSpec(p.shape, const_map) for p in flat]
    out_spec = pl.BlockSpec((block_batch, out_pad), lambda i: (i, 0))

    # Advisory cost estimate for the XLA scheduler.
    flops = 0
    bytes_accessed = pb * noise_dim * 4 + pb * out_pad * 4
    for (w, s) in hidden_layers + [(w_out, b_out)]:
        flops += 2 * pb * w.shape[0] * w.shape[1]
        bytes_accessed += w.size * 2 + s.size * 4       # bf16 weights, f32 shifts
    cost = pl.CostEstimate(flops=flops,
                           transcendentals=pb * out_pad,
                           bytes_accessed=bytes_accessed)

    kernel = functools.partial(_generator_kernel, n_hidden)
    out = pl.pallas_call(
        kernel,
        out_shape=jax.ShapeDtypeStruct((pb, out_pad), jnp.float32),
        grid=(pb // block_batch,),
        in_specs=in_specs,
        out_specs=out_spec,
        compiler_params=pltpu.CompilerParams(
            dimension_semantics=("parallel",),
            vmem_limit_bytes=32 * 1024 * 1024),
        cost_estimate=cost,
    )(noise, *flat)

    return out[:batch, :output_dim]


# ----------------------------------------------------------------------------
# Parameter construction (mirrors ThreatGenerator.__init__/_initialize_weights)
# ----------------------------------------------------------------------------
def make_threat_generator_params(key, noise_dim, output_dim, hidden_dims=None):
    """Raw (unfolded, unpadded, f32) parameters: per hidden layer
    (W[in,out], b, gamma, beta, running_mean, running_var), plus (W_out, b_out)."""
    if hidden_dims is None:
        max_dim = max(256, output_dim * 2)
        hidden_dims = [max_dim, max_dim // 2, max_dim // 4,
                       output_dim * 2 if output_dim > 32 else 64]

    def xavier_uniform(k, fan_in, fan_out):
        bound = math.sqrt(6.0 / (fan_in + fan_out))
        # stored as (in, out) -> forward computes x @ W
        return jax.random.uniform(k, (fan_in, fan_out), jnp.float32,
                                  minval=-bound, maxval=bound)

    keys = jax.random.split(key, len(hidden_dims) + 1)

    raw_layers = []
    in_dim = noise_dim
    for i, h_dim in enumerate(hidden_dims):
        w = xavier_uniform(keys[i], in_dim, h_dim)
        b = jnp.zeros((h_dim,), jnp.float32)
        gamma = jnp.ones((h_dim,), jnp.float32)
        beta = jnp.zeros((h_dim,), jnp.float32)
        running_mean = jnp.zeros((h_dim,), jnp.float32)
        running_var = jnp.ones((h_dim,), jnp.float32)
        raw_layers.append((w, b, gamma, beta, running_mean, running_var))
        in_dim = h_dim

    w_out = xavier_uniform(keys[-1], in_dim, output_dim)
    b_out = jnp.zeros((output_dim,), jnp.float32)
    return (raw_layers, (w_out, b_out)), hidden_dims


def fold_and_pad_params(raw_params, bn_eps=1e-5, lane=_LANE,
                        weight_dtype=jnp.bfloat16):
    """Fold eval-mode BatchNorm + bias into the weights.  Hidden widths are kept
    unpadded (they never leave VMEM); only the final output feature dim is
    zero-padded to a multiple of `lane` (128) for lane-dense HBM stores.
    Weights are stored in bf16 (MXU-native); shifts stay f32."""
    raw_layers, (w_out, b_out) = raw_params

    layers = []
    for (w, b, gamma, beta, mean, var) in raw_layers:
        scale = gamma / jnp.sqrt(var + bn_eps)
        shift = beta - mean * scale
        w_f = (w * scale[None, :]).astype(weight_dtype)       # fold BN scale
        s_f = (b * scale + shift).reshape(1, -1).astype(jnp.float32)
        layers.append((w_f, s_f))

    in_dim, out_dim = w_out.shape
    out_pad = _round_up(out_dim, lane)
    w_out_p = (jnp.zeros((in_dim, out_pad), jnp.float32)
               .at[:, :out_dim].set(w_out).astype(weight_dtype))
    b_out_p = jnp.zeros((1, out_pad), jnp.float32).at[0, :out_dim].set(b_out)
    return layers, (w_out_p, b_out_p)


# ----------------------------------------------------------------------------
# Pure-JAX reference (unfolded, unpadded, f32) for validation
# ----------------------------------------------------------------------------
def reference_forward(noise, raw_params, bn_eps=1e-5):
    raw_layers, (w_out, b_out) = raw_params
    h = noise
    for (w, b, gamma, beta, mean, var) in raw_layers:
        h = h @ w + b
        h = (h - mean) / jnp.sqrt(var + bn_eps) * gamma + beta
        h = jnp.where(h > 0, h, 0.2 * h)
    return jnp.tanh(h @ w_out + b_out)


if __name__ == "__main__":
    noise_dim = 32
    output_dim = 16
    batch = 256          # adaptive tiling picks block_batch=128 -> 2-step grid

    key = jax.random.PRNGKey(0)
    pkey, nkey = jax.random.split(key)

    raw_params, hidden_dims = make_threat_generator_params(pkey, noise_dim, output_dim)
    kernel_params = fold_and_pad_params(raw_params)
    noise = jax.random.normal(nkey, (batch, noise_dim), jnp.float32)

    out = threat_generator_forward(noise, kernel_params, output_dim=output_dim)
    out = jax.block_until_ready(out)

    ref = reference_forward(noise, raw_params)
    assert out.shape == (batch, output_dim), out.shape
    # bf16 MXU operands -> relaxed tolerance vs the f32 reference.
    max_err = float(jnp.max(jnp.abs(out - ref)))
    assert max_err < 5e-2, f"mismatch vs reference: max abs err {max_err}"

    print("KERNEL_OK")
</pallas_src>

<mosaic_0001>
module attributes {stable_mosaic.version = 11 : i64} {
  func.func @_generator_kernel(%arg0: i32, %arg1: memref<128x32xf32, #tpu.memory_space<vmem>>, %arg2: memref<32x256xbf16, #tpu.memory_space<vmem>>, %arg3: memref<1x256xf32, #tpu.memory_space<vmem>>, %arg4: memref<256x128xbf16, #tpu.memory_space<vmem>>, %arg5: memref<1x128xf32, #tpu.memory_space<vmem>>, %arg6: memref<128x64xbf16, #tpu.memory_space<vmem>>, %arg7: memref<1x64xf32, #tpu.memory_space<vmem>>, %arg8: memref<64x64xbf16, #tpu.memory_space<vmem>>, %arg9: memref<1x64xf32, #tpu.memory_space<vmem>>, %arg10: memref<64x128xbf16, #tpu.memory_space<vmem>>, %arg11: memref<1x128xf32, #tpu.memory_space<vmem>>, %arg12: memref<128x128xf32, #tpu.memory_space<vmem>>) attributes {dimension_semantics = [#tpu.dimension_semantics<parallel>], iteration_bounds = array<i64: 2>, scalar_prefetch = 0 : i64, scratch_operands = 0 : i64, tpu.core_type = #tpu.core_type<tc>, window_params = [{transform_indices = @transform_0, window_bounds = array<i64: 128, 32>}, {pipeline_mode = #tpu.pipeline_mode<synchronous>, transform_indices = @transform_1, window_bounds = array<i64: 32, 256>}, {pipeline_mode = #tpu.pipeline_mode<synchronous>, transform_indices = @transform_2, window_bounds = array<i64: 1, 256>}, {pipeline_mode = #tpu.pipeline_mode<synchronous>, transform_indices = @transform_3, window_bounds = array<i64: 256, 128>}, {pipeline_mode = #tpu.pipeline_mode<synchronous>, transform_indices = @transform_4, window_bounds = array<i64: 1, 128>}, {pipeline_mode = #tpu.pipeline_mode<synchronous>, transform_indices = @transform_5, window_bounds = array<i64: 128, 64>}, {pipeline_mode = #tpu.pipeline_mode<synchronous>, transform_indices = @transform_6, window_bounds = array<i64: 1, 64>}, {pipeline_mode = #tpu.pipeline_mode<synchronous>, transform_indices = @transform_7, window_bounds = array<i64: 64, 64>}, {pipeline_mode = #tpu.pipeline_mode<synchronous>, transform_indices = @transform_8, window_bounds = array<i64: 1, 64>}, {pipeline_mode = #tpu.pipeline_mode<synchronous>, transform_indices = @transform_9, window_bounds = array<i64: 64, 128>}, {pipeline_mode = #tpu.pipeline_mode<synchronous>, transform_indices = @transform_10, window_bounds = array<i64: 1, 128>}, {transform_indices = @transform_11, window_bounds = array<i64: 128, 128>}]} {
    %c0 = arith.constant 0 : index
    %c0_0 = arith.constant 0 : index
    %0 = vector.load %arg1[%c0, %c0_0] : memref<128x32xf32, #tpu.memory_space<vmem>>, vector<128x32xf32>
    %c0_1 = arith.constant 0 : index
    %c0_2 = arith.constant 0 : index
    %1 = vector.load %arg2[%c0_1, %c0_2] : memref<32x256xbf16, #tpu.memory_space<vmem>>, vector<32x256xbf16>
    %c0_3 = arith.constant 0 : index
    %c0_4 = arith.constant 0 : index
    %2 = vector.load %arg3[%c0_3, %c0_4] : memref<1x256xf32, #tpu.memory_space<vmem>>, vector<1x256xf32>
    %3 = arith.truncf %0 : vector<128x32xf32> to vector<128x32xbf16>
    %cst = arith.constant dense<0.000000e+00> : vector<128x256xf32>
    %4 = tpu.matmul %3, %1, %cst {dimension_numbers = #tpu.dot_dimension_numbers<[1], [0], [0], [1], [0, 0, 1, 1], [], []>} : vector<128x32xbf16>, vector<32x256xbf16>, vector<128x256xf32> -> vector<128x256xf32>
    %5 = vector.broadcast %2 : vector<1x256xf32> to vector<128x256xf32>
    %6 = arith.addf %4, %5 : vector<128x256xf32>
    %cst_5 = arith.constant 2.000000e-01 : f32
    %7 = vector.broadcast %cst_5 : f32 to vector<128x256xf32>
    %8 = arith.mulf %7, %6 : vector<128x256xf32>
    %9 = arith.maximumf %6, %8 : vector<128x256xf32>
    %c0_6 = arith.constant 0 : index
    %c0_7 = arith.constant 0 : index
    %10 = vector.load %arg4[%c0_6, %c0_7] : memref<256x128xbf16, #tpu.memory_space<vmem>>, vector<256x128xbf16>
    %c0_8 = arith.constant 0 : index
    %c0_9 = arith.constant 0 : index
    %11 = vector.load %arg5[%c0_8, %c0_9] : memref<1x128xf32, #tpu.memory_space<vmem>>, vector<1x128xf32>
    %12 = arith.truncf %9 : vector<128x256xf32> to vector<128x256xbf16>
    %cst_10 = arith.constant dense<0.000000e+00> : vector<128x128xf32>
    %13 = tpu.matmul %12, %10, %cst_10 {dimension_numbers = #tpu.dot_dimension_numbers<[1], [0], [0], [1], [0, 0, 1, 1], [], []>} : vector<128x256xbf16>, vector<256x128xbf16>, vector<128x128xf32> -> vector<128x128xf32>
    %14 = vector.broadcast %11 : vector<1x128xf32> to vector<128x128xf32>
    %15 = arith.addf %13, %14 : vector<128x128xf32>
    %cst_11 = arith.constant 2.000000e-01 : f32
    %16 = vector.broadcast %cst_11 : f32 to vector<128x128xf32>
    %17 = arith.mulf %16, %15 : vector<128x128xf32>
    %18 = arith.maximumf %15, %17 : vector<128x128xf32>
    %c0_12 = arith.constant 0 : index
    %c0_13 = arith.constant 0 : index
    %19 = vector.load %arg6[%c0_12, %c0_13] : memref<128x64xbf16, #tpu.memory_space<vmem>>, vector<128x64xbf16>
    %c0_14 = arith.constant 0 : index
    %c0_15 = arith.constant 0 : index
    %20 = vector.load %arg7[%c0_14, %c0_15] : memref<1x64xf32, #tpu.memory_space<vmem>>, vector<1x64xf32>
    %21 = arith.truncf %18 : vector<128x128xf32> to vector<128x128xbf16>
    %cst_16 = arith.constant dense<0.000000e+00> : vector<128x64xf32>
    %22 = tpu.matmul %21, %19, %cst_16 {dimension_numbers = #tpu.dot_dimension_numbers<[1], [0], [0], [1], [0, 0, 1, 1], [], []>} : vector<128x128xbf16>, vector<128x64xbf16>, vector<128x64xf32> -> vector<128x64xf32>
    %23 = vector.broadcast %20 : vector<1x64xf32> to vector<128x64xf32>
    %24 = arith.addf %22, %23 : vector<128x64xf32>
    %cst_17 = arith.constant 2.000000e-01 : f32
    %25 = vector.broadcast %cst_17 : f32 to vector<128x64xf32>
    %26 = arith.mulf %25, %24 : vector<128x64xf32>
    %27 = arith.maximumf %24, %26 : vector<128x64xf32>
    %c0_18 = arith.constant 0 : index
    %c0_19 = arith.constant 0 : index
    %28 = vector.load %arg8[%c0_18, %c0_19] : memref<64x64xbf16, #tpu.memory_space<vmem>>, vector<64x64xbf16>
    %c0_20 = arith.constant 0 : index
    %c0_21 = arith.constant 0 : index
    %29 = vector.load %arg9[%c0_20, %c0_21] : memref<1x64xf32, #tpu.memory_space<vmem>>, vector<1x64xf32>
    %30 = arith.truncf %27 : vector<128x64xf32> to vector<128x64xbf16>
    %cst_22 = arith.constant dense<0.000000e+00> : vector<128x64xf32>
    %31 = tpu.matmul %30, %28, %cst_22 {dimension_numbers = #tpu.dot_dimension_numbers<[1], [0], [0], [1], [0, 0, 1, 1], [], []>} : vector<128x64xbf16>, vector<64x64xbf16>, vector<128x64xf32> -> vector<128x64xf32>
    %32 = vector.broadcast %29 : vector<1x64xf32> to vector<128x64xf32>
    %33 = arith.addf %31, %32 : vector<128x64xf32>
    %cst_23 = arith.constant 2.000000e-01 : f32
    %34 = vector.broadcast %cst_23 : f32 to vector<128x64xf32>
    %35 = arith.mulf %34, %33 : vector<128x64xf32>
    %36 = arith.maximumf %33, %35 : vector<128x64xf32>
    %c0_24 = arith.constant 0 : index
    %c0_25 = arith.constant 0 : index
    %37 = vector.load %arg10[%c0_24, %c0_25] : memref<64x128xbf16, #tpu.memory_space<vmem>>, vector<64x128xbf16>
    %c0_26 = arith.constant 0 : index
    %c0_27 = arith.constant 0 : index
    %38 = vector.load %arg11[%c0_26, %c0_27] : memref<1x128xf32, #tpu.memory_space<vmem>>, vector<1x128xf32>
    %39 = arith.truncf %36 : vector<128x64xf32> to vector<128x64xbf16>
    %cst_28 = arith.constant dense<0.000000e+00> : vector<128x128xf32>
    %40 = tpu.matmul %39, %37, %cst_28 {dimension_numbers = #tpu.dot_dimension_numbers<[1], [0], [0], [1], [0, 0, 1, 1], [], []>} : vector<128x64xbf16>, vector<64x128xbf16>, vector<128x128xf32> -> vector<128x128xf32>
    %41 = vector.broadcast %38 : vector<1x128xf32> to vector<128x128xf32>
    %42 = arith.addf %40, %41 : vector<128x128xf32>
    %43 = math.tanh %42 : vector<128x128xf32>
    %c0_29 = arith.constant 0 : index
    %c0_30 = arith.constant 0 : index
    %44 = vector.load %arg12[%c0_29, %c0_30] : memref<128x128xf32, #tpu.memory_space<vmem>>, vector<128x128xf32>
    tpu.vector_store %arg12[%c0_29, %c0_30], %43 {strides = array<i32>} : memref<128x128xf32, #tpu.memory_space<vmem>>, vector<128x128xf32>,
    return
  }
  func.func @transform_0(%arg0: i32) -> (i32, i32) {
    %c0_i32 = arith.constant 0 : i32
    %c0_i32_0 = arith.constant 0 : i32
    return %arg0, %c0_i32 : i32, i32
  }
  func.func @transform_1(%arg0: i32) -> (i32, i32) {
    %c0_i32 = arith.constant 0 : i32
    %c0_i32_0 = arith.constant 0 : i32
    %c0_i32_1 = arith.constant 0 : i32
    return %c0_i32, %c0_i32_0 : i32, i32
  }
  func.func @transform_2(%arg0: i32) -> (i32, i32) {
    %c0_i32 = arith.constant 0 : i32
    %c0_i32_0 = arith.constant 0 : i32
    %c0_i32_1 = arith.constant 0 : i32
    return %c0_i32, %c0_i32_0 : i32, i32
  }
  func.func @transform_3(%arg0: i32) -> (i32, i32) {
    %c0_i32 = arith.constant 0 : i32
    %c0_i32_0 = arith.constant 0 : i32
    %c0_i32_1 = arith.constant 0 : i32
    return %c0_i32, %c0_i32_0 : i32, i32
  }
  func.func @transform_4(%arg0: i32) -> (i32, i32) {
    %c0_i32 = arith.constant 0 : i32
    %c0_i32_0 = arith.constant 0 : i32
    %c0_i32_1 = arith.constant 0 : i32
    return %c0_i32, %c0_i32_0 : i32, i32
  }
  func.func @transform_5(%arg0: i32) -> (i32, i32) {
    %c0_i32 = arith.constant 0 : i32
    %c0_i32_0 = arith.constant 0 : i32
    %c0_i32_1 = arith.constant 0 : i32
    return %c0_i32, %c0_i32_0 : i32, i32
  }
  func.func @transform_6(%arg0: i32) -> (i32, i32) {
    %c0_i32 = arith.constant 0 : i32
    %c0_i32_0 = arith.constant 0 : i32
    %c0_i32_1 = arith.constant 0 : i32
    return %c0_i32, %c0_i32_0 : i32, i32
  }
  func.func @transform_7(%arg0: i32) -> (i32, i32) {
    %c0_i32 = arith.constant 0 : i32
    %c0_i32_0 = arith.constant 0 : i32
    %c0_i32_1 = arith.constant 0 : i32
    return %c0_i32, %c0_i32_0 : i32, i32
  }
  func.func @transform_8(%arg0: i32) -> (i32, i32) {
    %c0_i32 = arith.constant 0 : i32
    %c0_i32_0 = arith.constant 0 : i32
    %c0_i32_1 = arith.constant 0 : i32
    return %c0_i32, %c0_i32_0 : i32, i32
  }
  func.func @transform_9(%arg0: i32) -> (i32, i32) {
    %c0_i32 = arith.constant 0 : i32
    %c0_i32_0 = arith.constant 0 : i32
    %c0_i32_1 = arith.constant 0 : i32
    return %c0_i32, %c0_i32_0 : i32, i32
  }
  func.func @transform_10(%arg0: i32) -> (i32, i32) {
    %c0_i32 = arith.constant 0 : i32
    %c0_i32_0 = arith.constant 0 : i32
    %c0_i32_1 = arith.constant 0 : i32
    return %c0_i32, %c0_i32_0 : i32, i32
  }
  func.func @transform_11(%arg0: i32) -> (i32, i32) {
    %c0_i32 = arith.constant 0 : i32
    %c0_i32_0 = arith.constant 0 : i32
    return %arg0, %c0_i32 : i32, i32
  }
}

</mosaic_0001>

<llo_original>
// kernel: threat_generator_forward.1
$region0: #{threat_generator_forward.1}
  #allocation0 [shape = 'u32[]', space=smem, size = 0x4, offset = 0x4, fixed_abs, tag = 'smem constant byte address 0x4 - core index']
  #allocation1 [shape = 'u32[144,128]{1,0:T(1,128)}', space=vmem, size = 0x12000, scoped, tag = 'internal scratch']
  %s0 = inlined_call_operand.vmem [shape: f32[256,32], index: 0, kind: input, shape index: {}]
  %s1 = inlined_call_operand.vmem [shape: bf16[32,256], index: 1, kind: input, shape index: {}]
  %s2 = inlined_call_operand.vmem [shape: f32[1,256], index: 2, kind: input, shape index: {}]
  %s3 = inlined_call_operand.vmem [shape: bf16[256,128], index: 3, kind: input, shape index: {}]
  %s4 = inlined_call_operand.vmem [shape: f32[1,128], index: 4, kind: input, shape index: {}]
  %s5 = inlined_call_operand.vmem [shape: bf16[128,64], index: 5, kind: input, shape index: {}]
  %s6 = inlined_call_operand.vmem [shape: f32[1,64], index: 6, kind: input, shape index: {}]
  %s7 = inlined_call_operand.vmem [shape: bf16[64,64], index: 7, kind: input, shape index: {}]
  %s8 = inlined_call_operand.vmem [shape: f32[1,64], index: 8, kind: input, shape index: {}]
  %s9 = inlined_call_operand.vmem [shape: bf16[64,128], index: 9, kind: input, shape index: {}]
  %s10 = inlined_call_operand.vmem [shape: f32[1,128], index: 10, kind: input, shape index: {}]
  %s11 = inlined_call_operand.vmem [shape: f32[256,128], index: 11, kind: output, shape index: {}]
  %s12 = sld [smem:[#allocation0]]
  $region77: #{threat_generator_forward.1} parent=0
    _
  %s14 = ssub.s32 1, %s12
  %s15 = scalar_select 0, %s14, %s12
  loop: start=0, step=1, limit=4
  $region2: #{threat_generator_forward.1} parent=0 // loop_pre_header
    _
  $region3: #{threat_generator_forward.1} parent=0 // loop_header
    %s17 = sphi 0, %s21
    %p18 = scmp.ge.s32.totalorder %s17, 4
    %s27 = sphi 0, %s29
    %s30 = sphi 0, %s27
    %s31 = sphi 0, %s30
    %s47 = sphi 0, %s31
    %s51 = sphi 0, %s51
    %s53 = sphi 0, %s51
    %s54 = sphi 0, %s53
    %s68 = sphi 0, %s54
    %s72 = sphi 0, %s72
    %s74 = sphi 0, %s72
    %s75 = sphi 0, %s74
    %s89 = sphi 0, %s75
    %s93 = sphi 0, %s93
    %s95 = sphi 0, %s93
    %s96 = sphi 0, %s95
    %s110 = sphi 0, %s96
    %s114 = sphi 0, %s114
    %s116 = sphi 0, %s114
    %s117 = sphi 0, %s116
    %s131 = sphi 0, %s117
    %s135 = sphi 0, %s135
    %s137 = sphi 0, %s135
    %s138 = sphi 0, %s137
    %s152 = sphi 0, %s138
    %s156 = sphi 0, %s156
    %s158 = sphi 0, %s156
    %s159 = sphi 0, %s158
    %s173 = sphi 0, %s159
    %s177 = sphi 0, %s177
    %s179 = sphi 0, %s177
    %s180 = sphi 0, %s179
    %s194 = sphi 0, %s180
    %s198 = sphi 0, %s198
    %s200 = sphi 0, %s198
    %s201 = sphi 0, %s200
    %s215 = sphi 0, %s201
    %s219 = sphi 0, %s219
    %s221 = sphi 0, %s219
    %s222 = sphi 0, %s221
    %s236 = sphi 0, %s222
    %s240 = sphi 0, %s240
    %s242 = sphi 0, %s240
    %s243 = sphi 0, %s242
    %s257 = sphi 0, %s243
    %s263 = sphi 0, %s265
    %s266 = sphi 0, %s263
    %s267 = sphi 0, %s266
    %s283 = sphi 0, %s267
  $region4: #{threat_generator_forward.1} parent=0 // loop_header_branch
    %20 = sbr.rel (%p18) target = $region8
  $region5: #{threat_generator_forward.1} parent=0 // loop_body
    %s22 = ssub.s32 %s17, 1
    %s23 = ssub.s32 %s17, 2
    %s24 = sadd.s32 %s17, 1
    %s25 = ssub.s32 %s17, %s24
    %p26 = scmp.eq.s32.totalorder %s25, 0
    %s28 = sadd.s32 %s27, 1
    %s29 = scalar_select %p26, %s27, %s28
    %p32 = pneg %p26
    %p33 = scmp.eq.s32.totalorder %s17, 1
    %p34 = por %p32, %p33
    %p35 = scmp.ne.s32.totalorder %s27, %s30
    %p36 = scmp.eq.s32.totalorder %s17, 0
    %p37 = por %p35, %p36
    %p38 = scmp.ne.s32.totalorder %s27, %s30
    %p39 = scmp.eq.s32.totalorder %s22, 1
    %p40 = por %p38, %p39
    %p41 = scmp.ne.s32.totalorder %s30, %s31
    %p42 = scmp.eq.s32.totalorder %s22, 0
    %p43 = por %p41, %p42
    %p44 = scmp.ne.s32.totalorder %s30, %s31
    %p45 = scmp.eq.s32.totalorder %s23, 1
    %p46 = por %p44, %p45
    %p48 = scmp.ne.s32.totalorder %s31, %s47
    %p49 = scmp.eq.s32.totalorder %s23, 0
    %p50 = por %p48, %p49
    %s52 = sadd.s32 %s51, 1
    %p55 = scmp.eq.s32.totalorder %s17, 1
    %p56 = scmp.ne.s32.totalorder %s51, %s53
    %p57 = scmp.eq.s32.totalorder %s17, 0
    %p58 = por %p56, %p57
    %p59 = scmp.ne.s32.totalorder %s51, %s53
    %p60 = scmp.eq.s32.totalorder %s22, 1
    %p61 = por %p59, %p60
    %p62 = scmp.ne.s32.totalorder %s53, %s54
    %p63 = scmp.eq.s32.totalorder %s22, 0
    %p64 = por %p62, %p63
    %p65 = scmp.ne.s32.totalorder %s53, %s54
    %p66 = scmp.eq.s32.totalorder %s23, 1
    %p67 = por %p65, %p66
    %p69 = scmp.ne.s32.totalorder %s54, %s68
    %p70 = scmp.eq.s32.totalorder %s23, 0
    %p71 = por %p69, %p70
    %s73 = sadd.s32 %s72, 1
    %p76 = scmp.eq.s32.totalorder %s17, 1
    %p77 = scmp.ne.s32.totalorder %s72, %s74
    %p78 = scmp.eq.s32.totalorder %s17, 0
    %p79 = por %p77, %p78
    %p80 = scmp.ne.s32.totalorder %s72, %s74
    %p81 = scmp.eq.s32.totalorder %s22, 1
    %p82 = por %p80, %p81
    %p83 = scmp.ne.s32.totalorder %s74, %s75
    %p84 = scmp.eq.s32.totalorder %s22, 0
    %p85 = por %p83, %p84
    %p86 = scmp.ne.s32.totalorder %s74, %s75
    %p87 = scmp.eq.s32.totalorder %s23, 1
    %p88 = por %p86, %p87
    %p90 = scmp.ne.s32.totalorder %s75, %s89
    %p91 = scmp.eq.s32.totalorder %s23, 0
    %p92 = por %p90, %p91
    %s94 = sadd.s32 %s93, 1
    %p97 = scmp.eq.s32.totalorder %s17, 1
    %p98 = scmp.ne.s32.totalorder %s93, %s95
    %p99 = scmp.eq.s32.totalorder %s17, 0
    %p100 = por %p98, %p99
    %p101 = scmp.ne.s32.totalorder %s93, %s95
    %p102 = scmp.eq.s32.totalorder %s22, 1
    %p103 = por %p101, %p102
    %p104 = scmp.ne.s32.totalorder %s95, %s96
    %p105 = scmp.eq.s32.totalorder %s22, 0
    %p106 = por %p104, %p105
    %p107 = scmp.ne.s32.totalorder %s95, %s96
    %p108 = scmp.eq.s32.totalorder %s23, 1
    %p109 = por %p107, %p108
    %p111 = scmp.ne.s32.totalorder %s96, %s110
    %p112 = scmp.eq.s32.totalorder %s23, 0
    %p113 = por %p111, %p112
    %s115 = sadd.s32 %s114, 1
    %p118 = scmp.eq.s32.totalorder %s17, 1
    %p119 = scmp.ne.s32.totalorder %s114, %s116
    %p120 = scmp.eq.s32.totalorder %s17, 0
    %p121 = por %p119, %p120
    %p122 = scmp.ne.s32.totalorder %s114, %s116
    %p123 = scmp.eq.s32.totalorder %s22, 1
    %p124 = por %p122, %p123
    %p125 = scmp.ne.s32.totalorder %s116, %s117
    %p126 = scmp.eq.s32.totalorder %s22, 0
    %p127 = por %p125, %p126
    %p128 = scmp.ne.s32.totalorder %s116, %s117
    %p129 = scmp.eq.s32.totalorder %s23, 1
    %p130 = por %p128, %p129
    %p132 = scmp.ne.s32.totalorder %s117, %s131
    %p133 = scmp.eq.s32.totalorder %s23, 0
    %p134 = por %p132, %p133
    %s136 = sadd.s32 %s135, 1
    %p139 = scmp.eq.s32.totalorder %s17, 1
    %p140 = scmp.ne.s32.totalorder %s135, %s137
    %p141 = scmp.eq.s32.totalorder %s17, 0
    %p142 = por %p140, %p141
    %p143 = scmp.ne.s32.totalorder %s135, %s137
    %p144 = scmp.eq.s32.totalorder %s22, 1
    %p145 = por %p143, %p144
    %p146 = scmp.ne.s32.totalorder %s137, %s138
    %p147 = scmp.eq.s32.totalorder %s22, 0
    %p148 = por %p146, %p147
    %p149 = scmp.ne.s32.totalorder %s137, %s138
    %p150 = scmp.eq.s32.totalorder %s23, 1
    %p151 = por %p149, %p150
    %p153 = scmp.ne.s32.totalorder %s138, %s152
    %p154 = scmp.eq.s32.totalorder %s23, 0
    %p155 = por %p153, %p154
    %s157 = sadd.s32 %s156, 1
    %p160 = scmp.eq.s32.totalorder %s17, 1
    %p161 = scmp.ne.s32.totalorder %s156, %s158
    %p162 = scmp.eq.s32.totalorder %s17, 0
    %p163 = por %p161, %p162
    %p164 = scmp.ne.s32.totalorder %s156, %s158
    %p165 = scmp.eq.s32.totalorder %s22, 1
    %p166 = por %p164, %p165
    %p167 = scmp.ne.s32.totalorder %s158, %s159
    %p168 = scmp.eq.s32.totalorder %s22, 0
    %p169 = por %p167, %p168
    %p170 = scmp.ne.s32.totalorder %s158, %s159
    %p171 = scmp.eq.s32.totalorder %s23, 1
    %p172 = por %p170, %p171
    %p174 = scmp.ne.s32.totalorder %s159, %s173
    %p175 = scmp.eq.s32.totalorder %s23, 0
    %p176 = por %p174, %p175
    %s178 = sadd.s32 %s177, 1
    %p181 = scmp.eq.s32.totalorder %s17, 1
    %p182 = scmp.ne.s32.totalorder %s177, %s179
    %p183 = scmp.eq.s32.totalorder %s17, 0
    %p184 = por %p182, %p183
    %p185 = scmp.ne.s32.totalorder %s177, %s179
    %p186 = scmp.eq.s32.totalorder %s22, 1
    %p187 = por %p185, %p186
    %p188 = scmp.ne.s32.totalorder %s179, %s180
    %p189 = scmp.eq.s32.totalorder %s22, 0
    %p190 = por %p188, %p189
    %p191 = scmp.ne.s32.totalorder %s179, %s180
    %p192 = scmp.eq.s32.totalorder %s23, 1
    %p193 = por %p191, %p192
    %p195 = scmp.ne.s32.totalorder %s180, %s194
    %p196 = scmp.eq.s32.totalorder %s23, 0
    %p197 = por %p195, %p196
    %s199 = sadd.s32 %s198, 1
    %p202 = scmp.eq.s32.totalorder %s17, 1
    %p203 = scmp.ne.s32.totalorder %s198, %s200
    %p204 = scmp.eq.s32.totalorder %s17, 0
    %p205 = por %p203, %p204
    %p206 = scmp.ne.s32.totalorder %s198, %s200
    %p207 = scmp.eq.s32.totalorder %s22, 1
    %p208 = por %p206, %p207
    %p209 = scmp.ne.s32.totalorder %s200, %s201
    %p210 = scmp.eq.s32.totalorder %s22, 0
    %p211 = por %p209, %p210
    %p212 = scmp.ne.s32.totalorder %s200, %s201
    %p213 = scmp.eq.s32.totalorder %s23, 1
    %p214 = por %p212, %p213
    %p216 = scmp.ne.s32.totalorder %s201, %s215
    %p217 = scmp.eq.s32.totalorder %s23, 0
    %p218 = por %p216, %p217
    %s220 = sadd.s32 %s219, 1
    %p223 = scmp.eq.s32.totalorder %s17, 1
    %p224 = scmp.ne.s32.totalorder %s219, %s221
    %p225 = scmp.eq.s32.totalorder %s17, 0
    %p226 = por %p224, %p225
    %p227 = scmp.ne.s32.totalorder %s219, %s221
    %p228 = scmp.eq.s32.totalorder %s22, 1
    %p229 = por %p227, %p228
    %p230 = scmp.ne.s32.totalorder %s221, %s222
    %p231 = scmp.eq.s32.totalorder %s22, 0
    %p232 = por %p230, %p231
    %p233 = scmp.ne.s32.totalorder %s221, %s222
    %p234 = scmp.eq.s32.totalorder %s23, 1
    %p235 = por %p233, %p234
    %p237 = scmp.ne.s32.totalorder %s222, %s236
    %p238 = scmp.eq.s32.totalorder %s23, 0
    %p239 = por %p237, %p238
    %s241 = sadd.s32 %s240, 1
    %p244 = scmp.eq.s32.totalorder %s17, 1
    %p245 = scmp.ne.s32.totalorder %s240, %s242
    %p246 = scmp.eq.s32.totalorder %s17, 0
    %p247 = por %p245, %p246
    %p248 = scmp.ne.s32.totalorder %s240, %s242
    %p249 = scmp.eq.s32.totalorder %s22, 1
    %p250 = por %p248, %p249
    %p251 = scmp.ne.s32.totalorder %s242, %s243
    %p252 = scmp.eq.s32.totalorder %s22, 0
    %p253 = por %p251, %p252
    %p254 = scmp.ne.s32.totalorder %s242, %s243
    %p255 = scmp.eq.s32.totalorder %s23, 1
    %p256 = por %p254, %p255
    %p258 = scmp.ne.s32.totalorder %s243, %s257
    %p259 = scmp.eq.s32.totalorder %s23, 0
    %p260 = por %p258, %p259
    %s261 = ssub.s32 %s17, %s24
    %p262 = scmp.eq.s32.totalorder %s261, 0
    %s264 = sadd.s32 %s263, 1
    %s265 = scalar_select %p262, %s263, %s264
    %p268 = pneg %p262
    %p269 = scmp.eq.s32.totalorder %s17, 1
    %p270 = por %p268, %p269
    %p271 = scmp.ne.s32.totalorder %s263, %s266
    %p272 = scmp.eq.s32.totalorder %s17, 0
    %p273 = por %p271, %p272
    %p274 = scmp.ne.s32.totalorder %s263, %s266
    %p275 = scmp.eq.s32.totalorder %s22, 1
    %p276 = por %p274, %p275
    %p277 = scmp.ne.s32.totalorder %s266, %s267
    %p278 = scmp.eq.s32.totalorder %s22, 0
    %p279 = por %p277, %p278
    %p280 = scmp.ne.s32.totalorder %s266, %s267
    %p281 = scmp.eq.s32.totalorder %s23, 1
    %p282 = por %p280, %p281
    %p284 = scmp.ne.s32.totalorder %s267, %s283
    %p285 = scmp.eq.s32.totalorder %s23, 0
    %p286 = por %p284, %p285
    %p287 = scmp.le.s32.totalorder 1, %s17
    %p288 = scmp.lt.s32.totalorder %s17, 3
    %p289 = pnand %p287, %p288
    %p290 = pneg %p289
    // Predicated region
    $region9: #{threat_generator_forward.1} parent=5 // pred_check
      _
    $region10: #{threat_generator_forward.1} parent=5 // pred_check_branch
      %292 = sbr.rel (%p289) target = $region12
    $region11: #{threat_generator_forward.1} parent=5 // pred_region
      %s293 = ssub.s32 %s17, 1
      // Predicated region
      $region13: #{threat_generator_forward.1} parent=11 // pred_check
        %p294 = pneg %p64
      $region14: #{threat_generator_forward.1} parent=11 // pred_check_branch
        %296 = sbr.rel (%p294) target = $region16
      $region15: #{threat_generator_forward.1} parent=11 // pred_region
        _
      $region16: #{threat_generator_forward.1} parent=11 // pred_fallthru
        _
      // Predicated region
      $region17: #{threat_generator_forward.1} parent=11 // pred_check
        %p297 = pneg %p85
      $region18: #{threat_generator_forward.1} parent=11 // pred_check_branch
        %299 = sbr.rel (%p297) target = $region20
      $region19: #{threat_generator_forward.1} parent=11 // pred_region
        _
      $region20: #{threat_generator_forward.1} parent=11 // pred_fallthru
        _
      // Predicated region
      $region21: #{threat_generator_forward.1} parent=11 // pred_check
        %p300 = pneg %p106
      $region22: #{threat_generator_forward.1} parent=11 // pred_check_branch
        %302 = sbr.rel (%p300) target = $region24
      $region23: #{threat_generator_forward.1} parent=11 // pred_region
        _
      $region24: #{threat_generator_forward.1} parent=11 // pred_fallthru
        _
      // Predicated region
      $region25: #{threat_generator_forward.1} parent=11 // pred_check
        %p303 = pneg %p127
      $region26: #{threat_generator_forward.1} parent=11 // pred_check_branch
        %305 = sbr.rel (%p303) target = $region28
      $region27: #{threat_generator_forward.1} parent=11 // pred_region
        _
      $region28: #{threat_generator_forward.1} parent=11 // pred_fallthru
        _
      // Predicated region
      $region29: #{threat_generator_forward.1} parent=11 // pred_check
        %p306 = pneg %p148
      $region30: #{threat_generator_forward.1} parent=11 // pred_check_branch
        %308 = sbr.rel (%p306) target = $region32
      $region31: #{threat_generator_forward.1} parent=11 // pred_region
        _
      $region32: #{threat_generator_forward.1} parent=11 // pred_fallthru
        _
      // Predicated region
      $region33: #{threat_generator_forward.1} parent=11 // pred_check
        %p309 = pneg %p169
      $region34: #{threat_generator_forward.1} parent=11 // pred_check_branch
        %311 = sbr.rel (%p309) target = $region36
      $region35: #{threat_generator_forward.1} parent=11 // pred_region
        _
      $region36: #{threat_generator_forward.1} parent=11 // pred_fallthru
        _
      // Predicated region
      $region37: #{threat_generator_forward.1} parent=11 // pred_check
        %p312 = pneg %p190
      $region38: #{threat_generator_forward.1} parent=11 // pred_check_branch
        %314 = sbr.rel (%p312) target = $region40
      $region39: #{threat_generator_forward.1} parent=11 // pred_region
        _
      $region40: #{threat_generator_forward.1} parent=11 // pred_fallthru
        _
      // Predicated region
      $region41: #{threat_generator_forward.1} parent=11 // pred_check
        %p315 = pneg %p211
      $region42: #{threat_generator_forward.1} parent=11 // pred_check_branch
        %317 = sbr.rel (%p315) target = $region44
      $region43: #{threat_generator_forward.1} parent=11 // pred_region
        _
      $region44: #{threat_generator_forward.1} parent=11 // pred_fallthru
        _
      // Predicated region
      $region45: #{threat_generator_forward.1} parent=11 // pred_check
        %p318 = pneg %p232
      $region46: #{threat_generator_forward.1} parent=11 // pred_check_branch
        %320 = sbr.rel (%p318) target = $region48
      $region47: #{threat_generator_forward.1} parent=11 // pred_region
        _
      $region48: #{threat_generator_forward.1} parent=11 // pred_fallthru
        _
      // Predicated region
      $region49: #{threat_generator_forward.1} parent=11 // pred_check
        %p321 = pneg %p253
      $region50: #{threat_generator_forward.1} parent=11 // pred_check_branch
        %323 = sbr.rel (%p321) target = $region52
      $region51: #{threat_generator_forward.1} parent=11 // pred_region
        _
      $region52: #{threat_generator_forward.1} parent=11 // pred_fallthru
        _
    $region12: #{threat_generator_forward.1} parent=5 // pred_fallthru
      _
    %p324 = scmp.lt.s32.totalorder %s17, 2
    // Predicated region
    $region53: #{threat_generator_forward.1} parent=5 // pred_check
      %p325 = pneg %p324
    $region54: #{threat_generator_forward.1} parent=5 // pred_check_branch
      %327 = sbr.rel (%p325) target = $region56
    $region55: #{threat_generator_forward.1} parent=5 // pred_region
      // Predicated region
      $region57: #{threat_generator_forward.1} parent=55 // pred_check
        %p328 = pneg %p37
      $region58: #{threat_generator_forward.1} parent=55 // pred_check_branch
        %330 = sbr.rel (%p328) target = $region60
      $region59: #{threat_generator_forward.1} parent=55 // pred_region
        %s331 = smul.u32 16, %s17
        %p332 = scmp.lt.s32.totalorder %s331, 31
        %s333 = scalar_select %p332, %s331, 31
        %s334 = smul.addr %s333, 8
        %s335 = scalar_lea.vmem %s0, %s334
        %s336 = smul.u32 16, %s17
      $region60: #{threat_generator_forward.1} parent=55 // pred_fallthru
        _
    $region56: #{threat_generator_forward.1} parent=5 // pred_fallthru
      _
    %p337 = scmp.le.s32.totalorder 1, %s17
    %p338 = scmp.lt.s32.totalorder %s17, 3
    %p339 = pnand %p337, %p338
    %p340 = pneg %p339
    // Predicated region
    $region61: #{threat_generator_forward.1} parent=5 // pred_check
      _
    $region62: #{threat_generator_forward.1} parent=5 // pred_check_branch
      %342 = sbr.rel (%p339) target = $region64
    $region63: #{threat_generator_forward.1} parent=5 // pred_region
      %s343 = ssub.s32 %s17, 1
      %s344 = smul.u32 16, %s22
      %p345 = scmp.lt.s32.totalorder %s344, 31
      %s346 = scalar_select %p345, %s344, 31
      %s347 = smul.addr %s346, 8
      %s348 = scalar_lea.vmem %s0, %s347
      %p349 = pneg %p43
      %p350 = pneg %p40
      %p351 = pneg %p64
      %p352 = pneg %p61
      %p353 = pneg %p85
      %p354 = pneg %p82
      %p355 = pneg %p106
      %p356 = pneg %p103
      %p357 = pneg %p127
      %p358 = pneg %p124
      %p359 = pneg %p148
      %p360 = pneg %p145
      %p361 = pneg %p169
      %p362 = pneg %p166
      %p363 = pneg %p190
      %p364 = pneg %p187
      %p365 = pneg %p211
      %p366 = pneg %p208
      %p367 = pneg %p232
      %p368 = pneg %p229
      %p369 = pneg %p253
      %p370 = pneg %p250
      %p371 = pneg %p279
      %p372 = pneg %p276
      %s373 = smul.u32 16, %s22
      %p374 = scmp.lt.s32.totalorder %s373, 31
      %s375 = scalar_select %p374, %s373, 31
      %s376 = smul.addr %s375, 8
      %s377 = scalar_lea.vmem %s11, %s376
      %s378 = smul.u32 16, %s22
      %p379 = scmp.lt.s32.totalorder %s378, 31
      %s380 = scalar_select %p379, %s378, 31
      %s381 = smul.addr %s380, 8
      %s382 = scalar_lea.vmem %s0, %s381
      %s383 = smul.u32 16, %s22
      %s384 = smul.u32 16, %s22
      %p385 = scmp.lt.s32.totalorder %s384, 31
      %s386 = scalar_select %p385, %s384, 31
      %s387 = smul.addr %s386, 8
      %s388 = scalar_lea.vmem %s11, %s387
      %s389 = smul.u32 16, %s22
      %v391 = vld [vmem:[%s382] sm:$0xff]
      %v392 = vld [vmem:[%s382 + $0x8] sm:$0xff]
      %v393 = vld [vmem:[%s382 + $0x10] sm:$0xff]
      %v394 = vld [vmem:[%s382 + $0x18] sm:$0xff]
      %v395 = vld [vmem:[%s382 + $0x20] sm:$0xff]
      %v396 = vld [vmem:[%s382 + $0x28] sm:$0xff]
      %v397 = vld [vmem:[%s382 + $0x30] sm:$0xff]
      %v398 = vld [vmem:[%s382 + $0x38] sm:$0xff]
      %v399 = vld [vmem:[%s382 + $0x40] sm:$0xff]
      %v400 = vld [vmem:[%s382 + $0x48] sm:$0xff]
      %v401 = vld [vmem:[%s382 + $0x50] sm:$0xff]
      %v402 = vld [vmem:[%s382 + $0x58] sm:$0xff]
      %v403 = vld [vmem:[%s382 + $0x60] sm:$0xff]
      %v404 = vld [vmem:[%s382 + $0x68] sm:$0xff]
      %v405 = vld [vmem:[%s382 + $0x70] sm:$0xff]
      %v406 = vld [vmem:[%s382 + $0x78] sm:$0xff]
      %v407 = vld [vmem:[%s1] sm:$0xff]
      %v408 = vld [vmem:[%s1 + $0x8] sm:$0xff]
      %v409 = vld [vmem:[%s1 + $0x10] sm:$0xff]
      %v410 = vld [vmem:[%s1 + $0x18] sm:$0xff]
      %v411 = vld [vmem:[%s2] sm:$0x3]
      %v412 = vpack.c.bf16 %v392, %v391
      %v413 = vpack.c.bf16 %v394, %v393
      %v414 = vpack.c.bf16 %v396, %v395
      %v415 = vpack.c.bf16 %v398, %v397
      %v416 = vpack.c.bf16 %v400, %v399
      %v417 = vpack.c.bf16 %v402, %v401
      %v418 = vpack.c.bf16 %v404, %v403
      %v419 = vpack.c.bf16 %v406, %v405
      %v421 = vlaneseq
      %v422 = vshrl.u32 %v421, 7
      %v423 = vsub.s32 0, %v422
      %v424 = vrot.slane %v411, %v423
      %v425 = vlaneseq
      %v426 = vshrl.u32 %v425, 7
      %v427 = vsub.s32 1, %v426
      %v428 = vrot.slane %v411, %v427
      %v435 = vunpack.c.l.b16 %v407
      %v436 = vunpack.c.h.b16 %v407
      %v437 = vunpack.c.l.b16 %v408
      %v438 = vunpack.c.h.b16 %v408
      %v439 = vunpack.c.l.b16 %v409
      %v440 = vunpack.c.h.b16 %v409
      %v441 = vunpack.c.l.b16 %v410
      %v442 = vunpack.c.h.b16 %v410
      %v443 = vpack.c.b16 %v437, %v435
      %v444 = vpack.c.b16 %v438, %v436
      %v445 = vpack.c.b16 %v441, %v439
      %v446 = vpack.c.b16 %v442, %v440
      %vm451 = vcmask 261120
      %v453 = vsel %vm451, %v412, 0
      %v456 = vsel %vm451, %v413, 0
      %v459 = vsel %vm451, %v414, 0
      %v462 = vsel %vm451, %v415, 0
      %v465 = vsel %vm451, %v416, 0
      %v468 = vsel %vm451, %v417, 0
      %v471 = vsel %vm451, %v418, 0
      %v474 = vsel %vm451, %v419, 0
      %476 = vmatprep.subr.bf16.mxu0 %v444
      %477 = vmatpush1.bf16.msra.mxu0 %v443
      %478 = vmatprep.subr.bf16.mxu0 %v446
      %479 = vmatpush1.bf16.msra.mxu0 %v445
      %480 = vmatprep.subr.bf16.mxu0 0
      %481 = vmatpush1.bf16.msra.mxu0 0
      %482 = vmatprep.subr.bf16.mxu0 0
      %483 = vmatpush1.bf16.msra.mxu0 0
      %484 = vmatprep.subr.bf16.mxu0 0
      %485 = vmatpush1.bf16.msra.mxu0 0
      %486 = vmatprep.subr.bf16.mxu0 0
      %487 = vmatpush1.bf16.msra.mxu0 0
      %488 = vmatprep.subr.bf16.mxu0 0
      %489 = vmatpush1.bf16.msra.mxu0 0
      %490 = vmatprep.subr.bf16.mxu0 0
      %491 = vmatpush1.bf16.msra.mxu0 0
      %492 = vmatprep.subr.bf16.mxu0 0
      %493 = vmatpush1.bf16.msra.mxu0 0
      %494 = vmatprep.subr.bf16.mxu0 0
      %495 = vmatpush1.bf16.msra.mxu0 0
      %496 = vmatprep.subr.bf16.mxu0 0
      %497 = vmatpush1.bf16.msra.mxu0 0
      %498 = vmatprep.subr.bf16.mxu0 0
      %499 = vmatpush1.bf16.msra.mxu0 0
      %500 = vmatprep.subr.bf16.mxu0 0
      %501 = vmatpush1.bf16.msra.mxu0 0
      %502 = vmatprep.subr.bf16.mxu0 0
      %503 = vmatpush1.bf16.msra.mxu0 0
      %504 = vmatprep.subr.bf16.mxu0 0
      %505 = vmatpush1.bf16.msra.mxu0 0
      %506 = vmatprep.subr.bf16.mxu0 0
      %507 = vmatpush1.bf16.msra.mxu0 0
      %508 = vmatprep.mubr.bf16.mxu0 0
      %509 = vmatmul.mubr.bf16.gmra.mrb[0].mxu0 %v453
      %v510 = vpop.f32.mrb[0].mxu0
      %v511 = vadd.f32 %v424, %v510
      %v512 = vpop.f32.mrb[0].mxu0
      %v513 = vadd.f32 %v428, %v512
      %v514 = vpop.f32.mrb[0].mxu0
      %v515 = vadd.f32 %v424, %v514
      %v516 = vpop.f32.mrb[0].mxu0
      %v517 = vadd.f32 %v428, %v516
      %518 = vmatprep.mubr.bf16.mxu0 0
      %519 = vmatmul.mubr.bf16.gmra.mrb[0].mxu0 %v456
      %v520 = vpop.f32.mrb[0].mxu0
      %v521 = vadd.f32 %v424, %v520
      %v522 = vpop.f32.mrb[0].mxu0
      %v523 = vadd.f32 %v428, %v522
      %v524 = vpop.f32.mrb[0].mxu0
      %v525 = vadd.f32 %v424, %v524
      %v526 = vpop.f32.mrb[0].mxu0
      %v527 = vadd.f32 %v428, %v526
      %528 = vmatprep.mubr.bf16.mxu0 0
      %529 = vmatmul.mubr.bf16.gmra.mrb[0].mxu0 %v459
      %v530 = vpop.f32.mrb[0].mxu0
      %v531 = vadd.f32 %v424, %v530
      %v532 = vpop.f32.mrb[0].mxu0
      %v533 = vadd.f32 %v428, %v532
      %v534 = vpop.f32.mrb[0].mxu0
      %v535 = vadd.f32 %v424, %v534
      %v536 = vpop.f32.mrb[0].mxu0
      %v537 = vadd.f32 %v428, %v536
      %538 = vmatprep.mubr.bf16.mxu0 0
      %539 = vmatmul.mubr.bf16.gmra.mrb[0].mxu0 %v462
      %v540 = vpop.f32.mrb[0].mxu0
      %v541 = vadd.f32 %v424, %v540
      %v542 = vpop.f32.mrb[0].mxu0
      %v543 = vadd.f32 %v428, %v542
      %v544 = vpop.f32.mrb[0].mxu0
      %v545 = vadd.f32 %v424, %v544
      %v546 = vpop.f32.mrb[0].mxu0
      %v547 = vadd.f32 %v428, %v546
      %548 = vmatprep.mubr.bf16.mxu0 0
      %549 = vmatmul.mubr.bf16.gmra.mrb[0].mxu0 %v465
      %v550 = vpop.f32.mrb[0].mxu0
      %v551 = vadd.f32 %v424, %v550
      %v552 = vpop.f32.mrb[0].mxu0
      %v553 = vadd.f32 %v428, %v552
      %v554 = vpop.f32.mrb[0].mxu0
      %v555 = vadd.f32 %v424, %v554
      %v556 = vpop.f32.mrb[0].mxu0
      %v557 = vadd.f32 %v428, %v556
      %558 = vmatprep.mubr.bf16.mxu0 0
      %559 = vmatmul.mubr.bf16.gmra.mrb[0].mxu0 %v468
      %v560 = vpop.f32.mrb[0].mxu0
      %v561 = vadd.f32 %v424, %v560
      %v562 = vpop.f32.mrb[0].mxu0
      %v563 = vadd.f32 %v428, %v562
      %v564 = vpop.f32.mrb[0].mxu0
      %v565 = vadd.f32 %v424, %v564
      %v566 = vpop.f32.mrb[0].mxu0
      %v567 = vadd.f32 %v428, %v566
      %568 = vmatprep.mubr.bf16.mxu0 0
      %569 = vmatmul.mubr.bf16.gmra.mrb[0].mxu0 %v471
      %v570 = vpop.f32.mrb[0].mxu0
      %v571 = vadd.f32 %v424, %v570
      %v572 = vpop.f32.mrb[0].mxu0
      %v573 = vadd.f32 %v428, %v572
      %v574 = vpop.f32.mrb[0].mxu0
      %v575 = vadd.f32 %v424, %v574
      %v576 = vpop.f32.mrb[0].mxu0
      %v577 = vadd.f32 %v428, %v576
      %578 = vmatprep.mubr.bf16.mxu0 0
      %579 = vmatmul.mubr.bf16.gmra.mrb[0].mxu0 %v474
      %v580 = vpop.f32.mrb[0].mxu0
      %v581 = vadd.f32 %v424, %v580
      %v582 = vpop.f32.mrb[0].mxu0
      %v583 = vadd.f32 %v428, %v582
      %v584 = vpop.f32.mrb[0].mxu0
      %v585 = vadd.f32 %v424, %v584
      %v586 = vpop.f32.mrb[0].mxu0
      %v587 = vadd.f32 %v428, %v586
      %588 = vdwg.mxu0
      %v589 = vmul.f32 %v511, 0.2
      %v590 = vmul.f32 %v513, 0.2
      %v591 = vmul.f32 %v515, 0.2
      %v592 = vmul.f32 %v517, 0.2
      %v593 = vmul.f32 %v521, 0.2
      %v594 = vmul.f32 %v523, 0.2
      %v595 = vmul.f32 %v525, 0.2
      %v596 = vmul.f32 %v527, 0.2
      %v597 = vmul.f32 %v531, 0.2
      %v598 = vmul.f32 %v533, 0.2
      %v599 = vmul.f32 %v535, 0.2
      %v600 = vmul.f32 %v537, 0.2
      %v601 = vmul.f32 %v541, 0.2
      %v602 = vmul.f32 %v543, 0.2
      %v603 = vmul.f32 %v545, 0.2
      %v604 = vmul.f32 %v547, 0.2
      %v605 = vmul.f32 %v551, 0.2
      %v606 = vmul.f32 %v553, 0.2
      %v607 = vmul.f32 %v555, 0.2
      %v608 = vmul.f32 %v557, 0.2
      %v609 = vmul.f32 %v561, 0.2
      %v610 = vmul.f32 %v563, 0.2
      %v611 = vmul.f32 %v565, 0.2
      %v612 = vmul.f32 %v567, 0.2
      %v613 = vmul.f32 %v571, 0.2
      %v614 = vmul.f32 %v573, 0.2
      %v615 = vmul.f32 %v575, 0.2
      %v616 = vmul.f32 %v577, 0.2
      %v617 = vmul.f32 %v581, 0.2
      %v618 = vmul.f32 %v583, 0.2
      %v619 = vmul.f32 %v585, 0.2
      %v620 = vmul.f32 %v587, 0.2
      %v621 = vmax.f32 %v511, %v589
      %v622 = vmax.f32 %v513, %v590
      %v623 = vmax.f32 %v515, %v591
      %v624 = vmax.f32 %v517, %v592
      %v625 = vmax.f32 %v521, %v593
      %v626 = vmax.f32 %v523, %v594
      %v627 = vmax.f32 %v525, %v595
      %v628 = vmax.f32 %v527, %v596
      %v629 = vmax.f32 %v531, %v597
      %v630 = vmax.f32 %v533, %v598
      %v631 = vmax.f32 %v535, %v599
      %v632 = vmax.f32 %v537, %v600
      %v633 = vmax.f32 %v541, %v601
      %v634 = vmax.f32 %v543, %v602
      %v635 = vmax.f32 %v545, %v603
      %v636 = vmax.f32 %v547, %v604
      %v637 = vmax.f32 %v551, %v605
      %v638 = vmax.f32 %v553, %v606
      %v639 = vmax.f32 %v555, %v607
      %v640 = vmax.f32 %v557, %v608
      %v641 = vmax.f32 %v561, %v609
      %v642 = vmax.f32 %v563, %v610
      %v643 = vmax.f32 %v565, %v611
      %v644 = vmax.f32 %v567, %v612
      %v645 = vmax.f32 %v571, %v613
      %v646 = vmax.f32 %v573, %v614
      %v647 = vmax.f32 %v575, %v615
      %v648 = vmax.f32 %v577, %v616
      %v649 = vmax.f32 %v581, %v617
      %v650 = vmax.f32 %v583, %v618
      %v651 = vmax.f32 %v585, %v619
      %v652 = vmax.f32 %v587, %v620
      %v653 = vld [vmem:[%s3] sm:$0xf]
      %v654 = vld [vmem:[%s3 + $0x4] sm:$0xf]
      %v655 = vld [vmem:[%s3 + $0x8] sm:$0xf]
      %v656 = vld [vmem:[%s3 + $0xc] sm:$0xf]
      %v657 = vld [vmem:[%s3 + $0x10] sm:$0xf]
      %v658 = vld [vmem:[%s3 + $0x14] sm:$0xf]
      %v659 = vld [vmem:[%s3 + $0x18] sm:$0xf]
      %v660 = vld [vmem:[%s3 + $0x1c] sm:$0xf]
      %v661 = vld [vmem:[%s3 + $0x20] sm:$0xf]
      %v662 = vld [vmem:[%s3 + $0x24] sm:$0xf]
      %v663 = vld [vmem:[%s3 + $0x28] sm:$0xf]
      %v664 = vld [vmem:[%s3 + $0x2c] sm:$0xf]
      %v665 = vld [vmem:[%s3 + $0x30] sm:$0xf]
      %v666 = vld [vmem:[%s3 + $0x34] sm:$0xf]
      %v667 = vld [vmem:[%s3 + $0x38] sm:$0xf]
      %v668 = vld [vmem:[%s3 + $0x3c] sm:$0xf]
      %v669 = vld [vmem:[%s3 + $0x40] sm:$0xf]
      %v670 = vld [vmem:[%s3 + $0x44] sm:$0xf]
      %v671 = vld [vmem:[%s3 + $0x48] sm:$0xf]
      %v672 = vld [vmem:[%s3 + $0x4c] sm:$0xf]
      %v673 = vld [vmem:[%s3 + $0x50] sm:$0xf]
      %v674 = vld [vmem:[%s3 + $0x54] sm:$0xf]
      %v675 = vld [vmem:[%s3 + $0x58] sm:$0xf]
      %v676 = vld [vmem:[%s3 + $0x5c] sm:$0xf]
      %v677 = vld [vmem:[%s3 + $0x60] sm:$0xf]
      %v678 = vld [vmem:[%s3 + $0x64] sm:$0xf]
      %v679 = vld [vmem:[%s3 + $0x68] sm:$0xf]
      %v680 = vld [vmem:[%s3 + $0x6c] sm:$0xf]
      %v681 = vld [vmem:[%s3 + $0x70] sm:$0xf]
      %v682 = vld [vmem:[%s3 + $0x74] sm:$0xf]
      %v683 = vld [vmem:[%s3 + $0x78] sm:$0xf]
      %v684 = vld [vmem:[%s3 + $0x7c] sm:$0xf]
      %v685 = vld [vmem:[%s4] sm:$0x1]
      %v686 = vpack.c.bf16 %v623, %v621
      %v687 = vpack.c.bf16 %v624, %v622
      %v688 = vpack.c.bf16 %v627, %v625
      %v689 = vpack.c.bf16 %v628, %v626
      %v690 = vpack.c.bf16 %v631, %v629
      %v691 = vpack.c.bf16 %v632, %v630
      %v692 = vpack.c.bf16 %v635, %v633
      %v693 = vpack.c.bf16 %v636, %v634
      %v694 = vpack.c.bf16 %v639, %v637
      %v695 = vpack.c.bf16 %v640, %v638
      %v696 = vpack.c.bf16 %v643, %v641
      %v697 = vpack.c.bf16 %v644, %v642
      %v698 = vpack.c.bf16 %v647, %v645
      %v699 = vpack.c.bf16 %v648, %v646
      %v700 = vpack.c.bf16 %v651, %v649
      %v701 = vpack.c.bf16 %v652, %v650
      %v703 = vlaneseq
      %v704 = vshrl.u32 %v703, 7
      %v705 = vsub.s32 0, %v704
      %v706 = vrot.slane %v685, %v705
      %v740 = vunpack.c.l.b16 %v653
      %v741 = vunpack.c.l.b16 %v654
      %v742 = vunpack.c.l.b16 %v655
      %v743 = vunpack.c.l.b16 %v656
      %v744 = vunpack.c.l.b16 %v657
      %v745 = vunpack.c.l.b16 %v658
      %v746 = vunpack.c.l.b16 %v659
      %v747 = vunpack.c.l.b16 %v660
      %v748 = vunpack.c.l.b16 %v661
      %v749 = vunpack.c.l.b16 %v662
      %v750 = vunpack.c.l.b16 %v663
      %v751 = vunpack.c.l.b16 %v664
      %v752 = vunpack.c.l.b16 %v665
      %v753 = vunpack.c.l.b16 %v666
      %v754 = vunpack.c.l.b16 %v667
      %v755 = vunpack.c.l.b16 %v668
      %v756 = vunpack.c.l.b16 %v669
      %v757 = vunpack.c.l.b16 %v670
      %v758 = vunpack.c.l.b16 %v671
      %v759 = vunpack.c.l.b16 %v672
      %v760 = vunpack.c.l.b16 %v673
      %v761 = vunpack.c.l.b16 %v674
      %v762 = vunpack.c.l.b16 %v675
      %v763 = vunpack.c.l.b16 %v676
      %v764 = vunpack.c.l.b16 %v677
      %v765 = vunpack.c.l.b16 %v678
      %v766 = vunpack.c.l.b16 %v679
      %v767 = vunpack.c.l.b16 %v680
      %v768 = vunpack.c.l.b16 %v681
      %v769 = vunpack.c.l.b16 %v682
      %v770 = vunpack.c.l.b16 %v683
      %v771 = vunpack.c.l.b16 %v684
      %v772 = vpack.c.b16 %v741, %v740
      %v773 = vpack.c.b16 %v743, %v742
      %v774 = vpack.c.b16 %v745, %v744
      %v775 = vpack.c.b16 %v747, %v746
      %v776 = vpack.c.b16 %v749, %v748
      %v777 = vpack.c.b16 %v751, %v750
      %v778 = vpack.c.b16 %v753, %v752
      %v779 = vpack.c.b16 %v755, %v754
      %v780 = vpack.c.b16 %v757, %v756
      %v781 = vpack.c.b16 %v759, %v758
      %v782 = vpack.c.b16 %v761, %v760
      %v783 = vpack.c.b16 %v763, %v762
      %v784 = vpack.c.b16 %v765, %v764
      %v785 = vpack.c.b16 %v767, %v766
      %v786 = vpack.c.b16 %v769, %v768
      %v787 = vpack.c.b16 %v771, %v770
      %804 = vmatprep.subr.bf16.mxu0 0
      %805 = vmatpush1.bf16.msra.mxu0 %v772
      %806 = vmatprep.subr.bf16.mxu0 0
      %807 = vmatpush1.bf16.msra.mxu0 %v773
      %808 = vmatprep.subr.bf16.mxu0 0
      %809 = vmatpush1.bf16.msra.mxu0 %v774
      %810 = vmatprep.subr.bf16.mxu0 0
      %811 = vmatpush1.bf16.msra.mxu0 %v775
      %812 = vmatprep.subr.bf16.mxu0 0
      %813 = vmatpush1.bf16.msra.mxu0 %v776
      %814 = vmatprep.subr.bf16.mxu0 0
      %815 = vmatpush1.bf16.msra.mxu0 %v777
      %816 = vmatprep.subr.bf16.mxu0 0
      %817 = vmatpush1.bf16.msra.mxu0 %v778
      %818 = vmatprep.subr.bf16.mxu0 0
      %819 = vmatpush1.bf16.msra.mxu0 %v779
      %820 = vmatprep.subr.bf16.mxu0 0
      %821 = vmatpush1.bf16.msra.mxu0 %v780
      %822 = vmatprep.subr.bf16.mxu0 0
      %823 = vmatpush1.bf16.msra.mxu0 %v781
      %824 = vmatprep.subr.bf16.mxu0 0
      %825 = vmatpush1.bf16.msra.mxu0 %v782
      %826 = vmatprep.subr.bf16.mxu0 0
      %827 = vmatpush1.bf16.msra.mxu0 %v783
      %828 = vmatprep.subr.bf16.mxu0 0
      %829 = vmatpush1.bf16.msra.mxu0 %v784
      %830 = vmatprep.subr.bf16.mxu0 0
      %831 = vmatpush1.bf16.msra.mxu0 %v785
      %832 = vmatprep.subr.bf16.mxu0 0
      %833 = vmatpush1.bf16.msra.mxu0 %v786
      %834 = vmatprep.subr.bf16.mxu0 0
      %835 = vmatpush1.bf16.msra.mxu0 %v787
      %836 = vmatprep.mubr.bf16.mxu0 %v687
      %837 = vmatmul.mubr.bf16.gmra.mrb[0].mxu0 %v686
      %v838 = vpop.f32.mrb[0].mxu0
      %v839 = vadd.f32 %v706, %v838
      %v840 = vpop.f32.mrb[0].mxu0
      %v841 = vpop.f32.mrb[0].mxu0
      %v842 = vadd.f32 %v706, %v841
      %v843 = vpop.f32.mrb[0].mxu0
      %844 = vmatprep.mubr.bf16.mxu0 %v689
      %845 = vmatmul.mubr.bf16.gmra.mrb[0].mxu0 %v688
      %v846 = vpop.f32.mrb[0].mxu0
      %v847 = vadd.f32 %v706, %v846
      %v848 = vpop.f32.mrb[0].mxu0
      %v849 = vpop.f32.mrb[0].mxu0
      %v850 = vadd.f32 %v706, %v849
      %v851 = vpop.f32.mrb[0].mxu0
      %852 = vmatprep.mubr.bf16.mxu0 %v691
      %853 = vmatmul.mubr.bf16.gmra.mrb[0].mxu0 %v690
      %v854 = vpop.f32.mrb[0].mxu0
      %v855 = vadd.f32 %v706, %v854
      %v856 = vpop.f32.mrb[0].mxu0
      %v857 = vpop.f32.mrb[0].mxu0
      %v858 = vadd.f32 %v706, %v857
      %v859 = vpop.f32.mrb[0].mxu0
      %860 = vmatprep.mubr.bf16.mxu0 %v693
      %861 = vmatmul.mubr.bf16.gmra.mrb[0].mxu0 %v692
      %v862 = vpop.f32.mrb[0].mxu0
      %v863 = vadd.f32 %v706, %v862
      %v864 = vpop.f32.mrb[0].mxu0
      %v865 = vpop.f32.mrb[0].mxu0
      %v866 = vadd.f32 %v706, %v865
      %v867 = vpop.f32.mrb[0].mxu0
      %868 = vmatprep.mubr.bf16.mxu0 %v695
      %869 = vmatmul.mubr.bf16.gmra.mrb[0].mxu0 %v694
      %v870 = vpop.f32.mrb[0].mxu0
      %v871 = vadd.f32 %v706, %v870
      %v872 = vpop.f32.mrb[0].mxu0
      %v873 = vpop.f32.mrb[0].mxu0
      %v874 = vadd.f32 %v706, %v873
      %v875 = vpop.f32.mrb[0].mxu0
      %876 = vmatprep.mubr.bf16.mxu0 %v697
      %877 = vmatmul.mubr.bf16.gmra.mrb[0].mxu0 %v696
      %v878 = vpop.f32.mrb[0].mxu0
      %v879 = vadd.f32 %v706, %v878
      %v880 = vpop.f32.mrb[0].mxu0
      %v881 = vpop.f32.mrb[0].mxu0
      %v882 = vadd.f32 %v706, %v881
      %v883 = vpop.f32.mrb[0].mxu0
      %884 = vmatprep.mubr.bf16.mxu0 %v699
      %885 = vmatmul.mubr.bf16.gmra.mrb[0].mxu0 %v698
      %v886 = vpop.f32.mrb[0].mxu0
      %v887 = vadd.f32 %v706, %v886
      %v888 = vpop.f32.mrb[0].mxu0
      %v889 = vpop.f32.mrb[0].mxu0
      %v890 = vadd.f32 %v706, %v889
      %v891 = vpop.f32.mrb[0].mxu0
      %892 = vmatprep.mubr.bf16.mxu0 %v701
      %893 = vmatmul.mubr.bf16.gmra.mrb[0].mxu0 %v700
      %v894 = vpop.f32.mrb[0].mxu0
      %v895 = vadd.f32 %v706, %v894
      %v896 = vpop.f32.mrb[0].mxu0
      %v897 = vpop.f32.mrb[0].mxu0
      %v898 = vadd.f32 %v706, %v897
      %v899 = vpop.f32.mrb[0].mxu0
      %900 = vdwg.mxu0
      %v901 = vmul.f32 %v839, 0.2
      %v902 = vmul.f32 %v842, 0.2
      %v903 = vmul.f32 %v847, 0.2
      %v904 = vmul.f32 %v850, 0.2
      %v905 = vmul.f32 %v855, 0.2
      %v906 = vmul.f32 %v858, 0.2
      %v907 = vmul.f32 %v863, 0.2
      %v908 = vmul.f32 %v866, 0.2
      %v909 = vmul.f32 %v871, 0.2
      %v910 = vmul.f32 %v874, 0.2
      %v911 = vmul.f32 %v879, 0.2
      %v912 = vmul.f32 %v882, 0.2
      %v913 = vmul.f32 %v887, 0.2
      %v914 = vmul.f32 %v890, 0.2
      %v915 = vmul.f32 %v895, 0.2
      %v916 = vmul.f32 %v898, 0.2
      %v917 = vmax.f32 %v839, %v901
      %v918 = vmax.f32 %v842, %v902
      %v919 = vmax.f32 %v847, %v903
      %v920 = vmax.f32 %v850, %v904
      %v921 = vmax.f32 %v855, %v905
      %v922 = vmax.f32 %v858, %v906
      %v923 = vmax.f32 %v863, %v907
      %v924 = vmax.f32 %v866, %v908
      %v925 = vmax.f32 %v871, %v909
      %v926 = vmax.f32 %v874, %v910
      %v927 = vmax.f32 %v879, %v911
      %v928 = vmax.f32 %v882, %v912
      %v929 = vmax.f32 %v887, %v913
      %v930 = vmax.f32 %v890, %v914
      %v931 = vmax.f32 %v895, %v915
      %v932 = vmax.f32 %v898, %v916
      %v933 = vld [vmem:[%s5] sm:$0xf]
      %v934 = vld [vmem:[%s5 + $0x4] sm:$0xf]
      %v935 = vld [vmem:[%s5 + $0x8] sm:$0xf]
      %v936 = vld [vmem:[%s5 + $0xc] sm:$0xf]
      %v937 = vld [vmem:[%s5 + $0x10] sm:$0xf]
      %v938 = vld [vmem:[%s5 + $0x14] sm:$0xf]
      %v939 = vld [vmem:[%s5 + $0x18] sm:$0xf]
      %v940 = vld [vmem:[%s5 + $0x1c] sm:$0xf]
      %v941 = vld [vmem:[%s5 + $0x20] sm:$0xf]
      %v942 = vld [vmem:[%s5 + $0x24] sm:$0xf]
      %v943 = vld [vmem:[%s5 + $0x28] sm:$0xf]
      %v944 = vld [vmem:[%s5 + $0x2c] sm:$0xf]
      %v945 = vld [vmem:[%s5 + $0x30] sm:$0xf]
      %v946 = vld [vmem:[%s5 + $0x34] sm:$0xf]
      %v947 = vld [vmem:[%s5 + $0x38] sm:$0xf]
      %v948 = vld [vmem:[%s5 + $0x3c] sm:$0xf]
      %v949 = vld [vmem:[%s6] sm:$0x1]
      %v950 = vpack.c.bf16 %v918, %v917
      %v951 = vpack.c.bf16 %v920, %v919
      %v952 = vpack.c.bf16 %v922, %v921
      %v953 = vpack.c.bf16 %v924, %v923
      %v954 = vpack.c.bf16 %v926, %v925
      %v955 = vpack.c.bf16 %v928, %v927
      %v956 = vpack.c.bf16 %v930, %v929
      %v957 = vpack.c.bf16 %v932, %v931
      %v959 = vlaneseq
      %v960 = vshrl.u32 %v959, 7
      %v961 = vsub.s32 0, %v960
      %v962 = vrot.slane %v949, %v961
      %v980 = vunpack.c.l.b16 %v933
      %v981 = vunpack.c.l.b16 %v934
      %v982 = vunpack.c.l.b16 %v935
      %v983 = vunpack.c.l.b16 %v936
      %v984 = vunpack.c.l.b16 %v937
      %v985 = vunpack.c.l.b16 %v938
      %v986 = vunpack.c.l.b16 %v939
      %v987 = vunpack.c.l.b16 %v940
      %v988 = vunpack.c.l.b16 %v941
      %v989 = vunpack.c.l.b16 %v942
      %v990 = vunpack.c.l.b16 %v943
      %v991 = vunpack.c.l.b16 %v944
      %v992 = vunpack.c.l.b16 %v945
      %v993 = vunpack.c.l.b16 %v946
      %v994 = vunpack.c.l.b16 %v947
      %v995 = vunpack.c.l.b16 %v948
      %v996 = vpack.c.b16 %v981, %v980
      %v997 = vpack.c.b16 %v983, %v982
      %v998 = vpack.c.b16 %v985, %v984
      %v999 = vpack.c.b16 %v987, %v986
      %v1000 = vpack.c.b16 %v989, %v988
      %v1001 = vpack.c.b16 %v991, %v990
      %v1002 = vpack.c.b16 %v993, %v992
      %v1003 = vpack.c.b16 %v995, %v994
      %1012 = vmatprep.subr.bf16.mxu0 0
      %1013 = vmatpush1.bf16.msra.mxu0 %v996
      %1014 = vmatprep.subr.bf16.mxu0 0
      %1015 = vmatpush1.bf16.msra.mxu0 %v997
      %1016 = vmatprep.subr.bf16.mxu0 0
      %1017 = vmatpush1.bf16.msra.mxu0 %v998
      %1018 = vmatprep.subr.bf16.mxu0 0
      %1019 = vmatpush1.bf16.msra.mxu0 %v999
      %1020 = vmatprep.subr.bf16.mxu0 0
      %1021 = vmatpush1.bf16.msra.mxu0 %v1000
      %1022 = vmatprep.subr.bf16.mxu0 0
      %1023 = vmatpush1.bf16.msra.mxu0 %v1001
      %1024 = vmatprep.subr.bf16.mxu0 0
      %1025 = vmatpush1.bf16.msra.mxu0 %v1002
      %1026 = vmatprep.subr.bf16.mxu0 0
      %1027 = vmatpush1.bf16.msra.mxu0 %v1003
      %1028 = vmatprep.subr.bf16.mxu0 0
      %1029 = vmatpush1.bf16.msra.mxu0 0
      %1030 = vmatprep.subr.bf16.mxu0 0
      %1031 = vmatpush1.bf16.msra.mxu0 0
      %1032 = vmatprep.subr.bf16.mxu0 0
      %1033 = vmatpush1.bf16.msra.mxu0 0
      %1034 = vmatprep.subr.bf16.mxu0 0
      %1035 = vmatpush1.bf16.msra.mxu0 0
      %1036 = vmatprep.subr.bf16.mxu0 0
      %1037 = vmatpush1.bf16.msra.mxu0 0
      %1038 = vmatprep.subr.bf16.mxu0 0
      %1039 = vmatpush1.bf16.msra.mxu0 0
      %1040 = vmatprep.subr.bf16.mxu0 0
      %1041 = vmatpush1.bf16.msra.mxu0 0
      %1042 = vmatprep.subr.bf16.mxu0 0
      %1043 = vmatpush1.bf16.msra.mxu0 0
      %1044 = vmatprep.mubr.bf16.mxu0 0
      %1045 = vmatmul.mubr.bf16.gmra.mrb[0].mxu0 %v950
      %v1046 = vpop.f32.mrb[0].mxu0
      %v1047 = vadd.f32 %v962, %v1046
      %v1048 = vpop.f32.mrb[0].mxu0
      %v1049 = vpop.f32.mrb[0].mxu0
      %v1050 = vadd.f32 %v962, %v1049
      %v1051 = vpop.f32.mrb[0].mxu0
      %1052 = vmatprep.mubr.bf16.mxu0 0
      %1053 = vmatmul.mubr.bf16.gmra.mrb[0].mxu0 %v951
      %v1054 = vpop.f32.mrb[0].mxu0
      %v1055 = vadd.f32 %v962, %v1054
      %v1056 = vpop.f32.mrb[0].mxu0
      %v1057 = vpop.f32.mrb[0].mxu0
      %v1058 = vadd.f32 %v962, %v1057
      %v1059 = vpop.f32.mrb[0].mxu0
      %1060 = vmatprep.mubr.bf16.mxu0 0
      %1061 = vmatmul.mubr.bf16.gmra.mrb[0].mxu0 %v952
      %v1062 = vpop.f32.mrb[0].mxu0
      %v1063 = vadd.f32 %v962, %v1062
      %v1064 = vpop.f32.mrb[0].mxu0
      %v1065 = vpop.f32.mrb[0].mxu0
      %v1066 = vadd.f32 %v962, %v1065
      %v1067 = vpop.f32.mrb[0].mxu0
      %1068 = vmatprep.mubr.bf16.mxu0 0
      %1069 = vmatmul.mubr.bf16.gmra.mrb[0].mxu0 %v953
      %v1070 = vpop.f32.mrb[0].mxu0
      %v1071 = vadd.f32 %v962, %v1070
      %v1072 = vpop.f32.mrb[0].mxu0
      %v1073 = vpop.f32.mrb[0].mxu0
      %v1074 = vadd.f32 %v962, %v1073
      %v1075 = vpop.f32.mrb[0].mxu0
      %1076 = vmatprep.mubr.bf16.mxu0 0
      %1077 = vmatmul.mubr.bf16.gmra.mrb[0].mxu0 %v954
      %v1078 = vpop.f32.mrb[0].mxu0
      %v1079 = vadd.f32 %v962, %v1078
      %v1080 = vpop.f32.mrb[0].mxu0
      %v1081 = vpop.f32.mrb[0].mxu0
      %v1082 = vadd.f32 %v962, %v1081
      %v1083 = vpop.f32.mrb[0].mxu0
      %1084 = vmatprep.mubr.bf16.mxu0 0
      %1085 = vmatmul.mubr.bf16.gmra.mrb[0].mxu0 %v955
      %v1086 = vpop.f32.mrb[0].mxu0
      %v1087 = vadd.f32 %v962, %v1086
      %v1088 = vpop.f32.mrb[0].mxu0
      %v1089 = vpop.f32.mrb[0].mxu0
      %v1090 = vadd.f32 %v962, %v1089
      %v1091 = vpop.f32.mrb[0].mxu0
      %1092 = vmatprep.mubr.bf16.mxu0 0
      %1093 = vmatmul.mubr.bf16.gmra.mrb[0].mxu0 %v956
      %v1094 = vpop.f32.mrb[0].mxu0
      %v1095 = vadd.f32 %v962, %v1094
      %v1096 = vpop.f32.mrb[0].mxu0
      %v1097 = vpop.f32.mrb[0].mxu0
      %v1098 = vadd.f32 %v962, %v1097
      %v1099 = vpop.f32.mrb[0].mxu0
      %1100 = vmatprep.mubr.bf16.mxu0 0
      %1101 = vmatmul.mubr.bf16.gmra.mrb[0].mxu0 %v957
      %v1102 = vpop.f32.mrb[0].mxu0
      %v1103 = vadd.f32 %v962, %v1102
      %v1104 = vpop.f32.mrb[0].mxu0
      %v1105 = vpop.f32.mrb[0].mxu0
      %v1106 = vadd.f32 %v962, %v1105
      %v1107 = vpop.f32.mrb[0].mxu0
      %1108 = vdwg.mxu0
      %v1109 = vmul.f32 %v1047, 0.2
      %v1110 = vmul.f32 %v1050, 0.2
      %v1111 = vmul.f32 %v1055, 0.2
      %v1112 = vmul.f32 %v1058, 0.2
      %v1113 = vmul.f32 %v1063, 0.2
      %v1114 = vmul.f32 %v1066, 0.2
      %v1115 = vmul.f32 %v1071, 0.2
      %v1116 = vmul.f32 %v1074, 0.2
      %v1117 = vmul.f32 %v1079, 0.2
      %v1118 = vmul.f32 %v1082, 0.2
      %v1119 = vmul.f32 %v1087, 0.2
      %v1120 = vmul.f32 %v1090, 0.2
      %v1121 = vmul.f32 %v1095, 0.2
      %v1122 = vmul.f32 %v1098, 0.2
      %v1123 = vmul.f32 %v1103, 0.2
      %v1124 = vmul.f32 %v1106, 0.2
      %v1125 = vmax.f32 %v1047, %v1109
      %v1126 = vmax.f32 %v1050, %v1110
      %v1127 = vmax.f32 %v1055, %v1111
      %v1128 = vmax.f32 %v1058, %v1112
      %v1129 = vmax.f32 %v1063, %v1113
      %v1130 = vmax.f32 %v1066, %v1114
      %v1131 = vmax.f32 %v1071, %v1115
      %v1132 = vmax.f32 %v1074, %v1116
      %v1133 = vmax.f32 %v1079, %v1117
      %v1134 = vmax.f32 %v1082, %v1118
      %v1135 = vmax.f32 %v1087, %v1119
      %v1136 = vmax.f32 %v1090, %v1120
      %v1137 = vmax.f32 %v1095, %v1121
      %v1138 = vmax.f32 %v1098, %v1122
      %v1139 = vmax.f32 %v1103, %v1123
      %v1140 = vmax.f32 %v1106, %v1124
      %v1141 = vld [vmem:[%s7] sm:$0xf]
      %v1142 = vld [vmem:[%s7 + $0x4] sm:$0xf]
      %v1143 = vld [vmem:[%s7 + $0x8] sm:$0xf]
      %v1144 = vld [vmem:[%s7 + $0xc] sm:$0xf]
      %v1145 = vld [vmem:[%s7 + $0x10] sm:$0xf]
      %v1146 = vld [vmem:[%s7 + $0x14] sm:$0xf]
      %v1147 = vld [vmem:[%s7 + $0x18] sm:$0xf]
      %v1148 = vld [vmem:[%s7 + $0x1c] sm:$0xf]
      %v1149 = vld [vmem:[%s8] sm:$0x1]
      %v1150 = vpack.c.bf16 %v1126, %v1125
      %v1151 = vpack.c.bf16 %v1128, %v1127
      %v1152 = vpack.c.bf16 %v1130, %v1129
      %v1153 = vpack.c.bf16 %v1132, %v1131
      %v1154 = vpack.c.bf16 %v1134, %v1133
      %v1155 = vpack.c.bf16 %v1136, %v1135
      %v1156 = vpack.c.bf16 %v1138, %v1137
      %v1157 = vpack.c.bf16 %v1140, %v1139
      %v1159 = vlaneseq
      %v1160 = vshrl.u32 %v1159, 7
      %v1161 = vsub.s32 0, %v1160
      %v1162 = vrot.slane %v1149, %v1161
      %v1172 = vunpack.c.l.b16 %v1141
      %v1173 = vunpack.c.l.b16 %v1142
      %v1174 = vunpack.c.l.b16 %v1143
      %v1175 = vunpack.c.l.b16 %v1144
      %v1176 = vunpack.c.l.b16 %v1145
      %v1177 = vunpack.c.l.b16 %v1146
      %v1178 = vunpack.c.l.b16 %v1147
      %v1179 = vunpack.c.l.b16 %v1148
      %v1180 = vpack.c.b16 %v1173, %v1172
      %v1181 = vpack.c.b16 %v1175, %v1174
      %v1182 = vpack.c.b16 %v1177, %v1176
      %v1183 = vpack.c.b16 %v1179, %v1178
      %vm1188 = vcmask 523264
      %v1190 = vsel %vm1188, %v1150, 0
      %v1193 = vsel %vm1188, %v1151, 0
      %v1196 = vsel %vm1188, %v1152, 0
      %v1199 = vsel %vm1188, %v1153, 0
      %v1202 = vsel %vm1188, %v1154, 0
      %v1205 = vsel %vm1188, %v1155, 0
      %v1208 = vsel %vm1188, %v1156, 0
      %v1211 = vsel %vm1188, %v1157, 0
      %1213 = vmatprep.subr.bf16.mxu0 0
      %1214 = vmatpush1.bf16.msra.mxu0 %v1180
      %1215 = vmatprep.subr.bf16.mxu0 0
      %1216 = vmatpush1.bf16.msra.mxu0 %v1181
      %1217 = vmatprep.subr.bf16.mxu0 0
      %1218 = vmatpush1.bf16.msra.mxu0 %v1182
      %1219 = vmatprep.subr.bf16.mxu0 0
      %1220 = vmatpush1.bf16.msra.mxu0 %v1183
      %1221 = vmatprep.subr.bf16.mxu0 0
      %1222 = vmatpush1.bf16.msra.mxu0 0
      %1223 = vmatprep.subr.bf16.mxu0 0
      %1224 = vmatpush1.bf16.msra.mxu0 0
      %1225 = vmatprep.subr.bf16.mxu0 0
      %1226 = vmatpush1.bf16.msra.mxu0 0
      %1227 = vmatprep.subr.bf16.mxu0 0
      %1228 = vmatpush1.bf16.msra.mxu0 0
      %1229 = vmatprep.subr.bf16.mxu0 0
      %1230 = vmatpush1.bf16.msra.mxu0 0
      %1231 = vmatprep.subr.bf16.mxu0 0
      %1232 = vmatpush1.bf16.msra.mxu0 0
      %1233 = vmatprep.subr.bf16.mxu0 0
      %1234 = vmatpush1.bf16.msra.mxu0 0
      %1235 = vmatprep.subr.bf16.mxu0 0
      %1236 = vmatpush1.bf16.msra.mxu0 0
      %1237 = vmatprep.subr.bf16.mxu0 0
      %1238 = vmatpush1.bf16.msra.mxu0 0
      %1239 = vmatprep.subr.bf16.mxu0 0
      %1240 = vmatpush1.bf16.msra.mxu0 0
      %1241 = vmatprep.subr.bf16.mxu0 0
      %1242 = vmatpush1.bf16.msra.mxu0 0
      %1243 = vmatprep.subr.bf16.mxu0 0
      %1244 = vmatpush1.bf16.msra.mxu0 0
      %1245 = vmatprep.mubr.bf16.mxu0 0
      %1246 = vmatmul.mubr.bf16.gmra.mrb[0].mxu0 %v1190
      %v1247 = vpop.f32.mrb[0].mxu0
      %v1248 = vadd.f32 %v1162, %v1247
      %v1249 = vpop.f32.mrb[0].mxu0
      %v1250 = vpop.f32.mrb[0].mxu0
      %v1251 = vadd.f32 %v1162, %v1250
      %v1252 = vpop.f32.mrb[0].mxu0
      %1253 = vmatprep.mubr.bf16.mxu0 0
      %1254 = vmatmul.mubr.bf16.gmra.mrb[0].mxu0 %v1193
      %v1255 = vpop.f32.mrb[0].mxu0
      %v1256 = vadd.f32 %v1162, %v1255
      %v1257 = vpop.f32.mrb[0].mxu0
      %v1258 = vpop.f32.mrb[0].mxu0
      %v1259 = vadd.f32 %v1162, %v1258
      %v1260 = vpop.f32.mrb[0].mxu0
      %1261 = vmatprep.mubr.bf16.mxu0 0
      %1262 = vmatmul.mubr.bf16.gmra.mrb[0].mxu0 %v1196
      %v1263 = vpop.f32.mrb[0].mxu0
      %v1264 = vadd.f32 %v1162, %v1263
      %v1265 = vpop.f32.mrb[0].mxu0
      %v1266 = vpop.f32.mrb[0].mxu0
      %v1267 = vadd.f32 %v1162, %v1266
      %v1268 = vpop.f32.mrb[0].mxu0
      %1269 = vmatprep.mubr.bf16.mxu0 0
      %1270 = vmatmul.mubr.bf16.gmra.mrb[0].mxu0 %v1199
      %v1271 = vpop.f32.mrb[0].mxu0
      %v1272 = vadd.f32 %v1162, %v1271
      %v1273 = vpop.f32.mrb[0].mxu0
      %v1274 = vpop.f32.mrb[0].mxu0
      %v1275 = vadd.f32 %v1162, %v1274
      %v1276 = vpop.f32.mrb[0].mxu0
      %1277 = vmatprep.mubr.bf16.mxu0 0
      %1278 = vmatmul.mubr.bf16.gmra.mrb[0].mxu0 %v1202
      %v1279 = vpop.f32.mrb[0].mxu0
      %v1280 = vadd.f32 %v1162, %v1279
      %v1281 = vpop.f32.mrb[0].mxu0
      %v1282 = vpop.f32.mrb[0].mxu0
      %v1283 = vadd.f32 %v1162, %v1282
      %v1284 = vpop.f32.mrb[0].mxu0
      %1285 = vmatprep.mubr.bf16.mxu0 0
      %1286 = vmatmul.mubr.bf16.gmra.mrb[0].mxu0 %v1205
      %v1287 = vpop.f32.mrb[0].mxu0
      %v1288 = vadd.f32 %v1162, %v1287
      %v1289 = vpop.f32.mrb[0].mxu0
      %v1290 = vpop.f32.mrb[0].mxu0
      %v1291 = vadd.f32 %v1162, %v1290
      %v1292 = vpop.f32.mrb[0].mxu0
      %1293 = vmatprep.mubr.bf16.mxu0 0
      %1294 = vmatmul.mubr.bf16.gmra.mrb[0].mxu0 %v1208
      %v1295 = vpop.f32.mrb[0].mxu0
      %v1296 = vadd.f32 %v1162, %v1295
      %v1297 = vpop.f32.mrb[0].mxu0
      %v1298 = vpop.f32.mrb[0].mxu0
      %v1299 = vadd.f32 %v1162, %v1298
      %v1300 = vpop.f32.mrb[0].mxu0
      %1301 = vmatprep.mubr.bf16.mxu0 0
      %1302 = vmatmul.mubr.bf16.gmra.mrb[0].mxu0 %v1211
      %v1303 = vpop.f32.mrb[0].mxu0
      %v1304 = vadd.f32 %v1162, %v1303
      %v1305 = vpop.f32.mrb[0].mxu0
      %v1306 = vpop.f32.mrb[0].mxu0
      %v1307 = vadd.f32 %v1162, %v1306
      %v1308 = vpop.f32.mrb[0].mxu0
      %1309 = vdwg.mxu0
      %v1310 = vmul.f32 %v1248, 0.2
      %v1311 = vmul.f32 %v1251, 0.2
      %v1312 = vmul.f32 %v1256, 0.2
      %v1313 = vmul.f32 %v1259, 0.2
      %v1314 = vmul.f32 %v1264, 0.2
      %v1315 = vmul.f32 %v1267, 0.2
      %v1316 = vmul.f32 %v1272, 0.2
      %v1317 = vmul.f32 %v1275, 0.2
      %v1318 = vmul.f32 %v1280, 0.2
      %v1319 = vmul.f32 %v1283, 0.2
      %v1320 = vmul.f32 %v1288, 0.2
      %v1321 = vmul.f32 %v1291, 0.2
      %v1322 = vmul.f32 %v1296, 0.2
      %v1323 = vmul.f32 %v1299, 0.2
      %v1324 = vmul.f32 %v1304, 0.2
      %v1325 = vmul.f32 %v1307, 0.2
      %v1326 = vmax.f32 %v1248, %v1310
      %v1327 = vmax.f32 %v1251, %v1311
      %v1328 = vmax.f32 %v1256, %v1312
      %v1329 = vmax.f32 %v1259, %v1313
      %v1330 = vmax.f32 %v1264, %v1314
      %v1331 = vmax.f32 %v1267, %v1315
      %v1332 = vmax.f32 %v1272, %v1316
      %v1333 = vmax.f32 %v1275, %v1317
      %v1334 = vmax.f32 %v1280, %v1318
      %v1335 = vmax.f32 %v1283, %v1319
      %v1336 = vmax.f32 %v1288, %v1320
      %v1337 = vmax.f32 %v1291, %v1321
      %v1338 = vmax.f32 %v1296, %v1322
      %v1339 = vmax.f32 %v1299, %v1323
      %v1340 = vmax.f32 %v1304, %v1324
      %v1341 = vmax.f32 %v1307, %v1325
      %v1342 = vld [vmem:[%s9] sm:$0xf]
      %v1343 = vld [vmem:[%s9 + $0x4] sm:$0xf]
      %v1344 = vld [vmem:[%s9 + $0x8] sm:$0xf]
      %v1345 = vld [vmem:[%s9 + $0xc] sm:$0xf]
      %v1346 = vld [vmem:[%s9 + $0x10] sm:$0xf]
      %v1347 = vld [vmem:[%s9 + $0x14] sm:$0xf]
      %v1348 = vld [vmem:[%s9 + $0x18] sm:$0xf]
      %v1349 = vld [vmem:[%s9 + $0x1c] sm:$0xf]
      %v1350 = vld [vmem:[%s10] sm:$0x1]
      %v1351 = vpack.c.bf16 %v1327, %v1326
      %v1352 = vpack.c.bf16 %v1329, %v1328
      %v1353 = vpack.c.bf16 %v1331, %v1330
      %v1354 = vpack.c.bf16 %v1333, %v1332
      %v1355 = vpack.c.bf16 %v1335, %v1334
      %v1356 = vpack.c.bf16 %v1337, %v1336
      %v1357 = vpack.c.bf16 %v1339, %v1338
      %v1358 = vpack.c.bf16 %v1341, %v1340
      %v1360 = vlaneseq
      %v1361 = vshrl.u32 %v1360, 7
      %v1362 = vsub.s32 0, %v1361
      %v1363 = vrot.slane %v1350, %v1362
      %v1373 = vunpack.c.l.b16 %v1342
      %v1374 = vunpack.c.l.b16 %v1343
      %v1375 = vunpack.c.l.b16 %v1344
      %v1376 = vunpack.c.l.b16 %v1345
      %v1377 = vunpack.c.l.b16 %v1346
      %v1378 = vunpack.c.l.b16 %v1347
      %v1379 = vunpack.c.l.b16 %v1348
      %v1380 = vunpack.c.l.b16 %v1349
      %v1381 = vpack.c.b16 %v1374, %v1373
      %v1382 = vpack.c.b16 %v1376, %v1375
      %v1383 = vpack.c.b16 %v1378, %v1377
      %v1384 = vpack.c.b16 %v1380, %v1379
      %v1390 = vsel %vm1188, %v1351, 0
      %v1393 = vsel %vm1188, %v1352, 0
      %v1396 = vsel %vm1188, %v1353, 0
      %v1399 = vsel %vm1188, %v1354, 0
      %v1402 = vsel %vm1188, %v1355, 0
      %v1405 = vsel %vm1188, %v1356, 0
      %v1408 = vsel %vm1188, %v1357, 0
      %v1411 = vsel %vm1188, %v1358, 0
      %1413 = vmatprep.subr.bf16.mxu0 0
      %1414 = vmatpush1.bf16.msra.mxu0 %v1381
      %1415 = vmatprep.subr.bf16.mxu0 0
      %1416 = vmatpush1.bf16.msra.mxu0 %v1382
      %1417 = vmatprep.subr.bf16.mxu0 0
      %1418 = vmatpush1.bf16.msra.mxu0 %v1383
      %1419 = vmatprep.subr.bf16.mxu0 0
      %1420 = vmatpush1.bf16.msra.mxu0 %v1384
      %1421 = vmatprep.subr.bf16.mxu0 0
      %1422 = vmatpush1.bf16.msra.mxu0 0
      %1423 = vmatprep.subr.bf16.mxu0 0
      %1424 = vmatpush1.bf16.msra.mxu0 0
      %1425 = vmatprep.subr.bf16.mxu0 0
      %1426 = vmatpush1.bf16.msra.mxu0 0
      %1427 = vmatprep.subr.bf16.mxu0 0
      %1428 = vmatpush1.bf16.msra.mxu0 0
      %1429 = vmatprep.subr.bf16.mxu0 0
      %1430 = vmatpush1.bf16.msra.mxu0 0
      %1431 = vmatprep.subr.bf16.mxu0 0
      %1432 = vmatpush1.bf16.msra.mxu0 0
      %1433 = vmatprep.subr.bf16.mxu0 0
      %1434 = vmatpush1.bf16.msra.mxu0 0
      %1435 = vmatprep.subr.bf16.mxu0 0
      %1436 = vmatpush1.bf16.msra.mxu0 0
      %1437 = vmatprep.subr.bf16.mxu0 0
      %1438 = vmatpush1.bf16.msra.mxu0 0
      %1439 = vmatprep.subr.bf16.mxu0 0
      %1440 = vmatpush1.bf16.msra.mxu0 0
      %1441 = vmatprep.subr.bf16.mxu0 0
      %1442 = vmatpush1.bf16.msra.mxu0 0
      %1443 = vmatprep.subr.bf16.mxu0 0
      %1444 = vmatpush1.bf16.msra.mxu0 0
      %1445 = vmatprep.mubr.bf16.mxu0 0
      %1446 = vmatmul.mubr.bf16.gmra.mrb[0].mxu0 %v1390
      %v1447 = vpop.f32.mrb[0].mxu0
      %v1448 = vadd.f32 %v1363, %v1447
      %v1449 = vpop.f32.mrb[0].mxu0
      %v1450 = vpop.f32.mrb[0].mxu0
      %v1451 = vadd.f32 %v1363, %v1450
      %v1452 = vpop.f32.mrb[0].mxu0
      %1453 = vmatprep.mubr.bf16.mxu0 0
      %1454 = vmatmul.mubr.bf16.gmra.mrb[0].mxu0 %v1393
      %v1455 = vpop.f32.mrb[0].mxu0
      %v1456 = vadd.f32 %v1363, %v1455
      %v1457 = vpop.f32.mrb[0].mxu0
      %v1458 = vpop.f32.mrb[0].mxu0
      %v1459 = vadd.f32 %v1363, %v1458
      %v1460 = vpop.f32.mrb[0].mxu0
      %1461 = vmatprep.mubr.bf16.mxu0 0
      %1462 = vmatmul.mubr.bf16.gmra.mrb[0].mxu0 %v1396
      %v1463 = vpop.f32.mrb[0].mxu0
      %v1464 = vadd.f32 %v1363, %v1463
      %v1465 = vpop.f32.mrb[0].mxu0
      %v1466 = vpop.f32.mrb[0].mxu0
      %v1467 = vadd.f32 %v1363, %v1466
      %v1468 = vpop.f32.mrb[0].mxu0
      %1469 = vmatprep.mubr.bf16.mxu0 0
      %1470 = vmatmul.mubr.bf16.gmra.mrb[0].mxu0 %v1399
      %v1471 = vpop.f32.mrb[0].mxu0
      %v1472 = vadd.f32 %v1363, %v1471
      %v1473 = vpop.f32.mrb[0].mxu0
      %v1474 = vpop.f32.mrb[0].mxu0
      %v1475 = vadd.f32 %v1363, %v1474
      %v1476 = vpop.f32.mrb[0].mxu0
      %1477 = vmatprep.mubr.bf16.mxu0 0
      %1478 = vmatmul.mubr.bf16.gmra.mrb[0].mxu0 %v1402
      %v1479 = vpop.f32.mrb[0].mxu0
      %v1480 = vadd.f32 %v1363, %v1479
      %v1481 = vpop.f32.mrb[0].mxu0
      %v1482 = vpop.f32.mrb[0].mxu0
      %v1483 = vadd.f32 %v1363, %v1482
      %v1484 = vpop.f32.mrb[0].mxu0
      %1485 = vmatprep.mubr.bf16.mxu0 0
      %1486 = vmatmul.mubr.bf16.gmra.mrb[0].mxu0 %v1405
      %v1487 = vpop.f32.mrb[0].mxu0
      %v1488 = vadd.f32 %v1363, %v1487
      %v1489 = vpop.f32.mrb[0].mxu0
      %v1490 = vpop.f32.mrb[0].mxu0
      %v1491 = vadd.f32 %v1363, %v1490
      %v1492 = vpop.f32.mrb[0].mxu0
      %1493 = vmatprep.mubr.bf16.mxu0 0
      %1494 = vmatmul.mubr.bf16.gmra.mrb[0].mxu0 %v1408
      %v1495 = vpop.f32.mrb[0].mxu0
      %v1496 = vadd.f32 %v1363, %v1495
      %v1497 = vpop.f32.mrb[0].mxu0
      %v1498 = vpop.f32.mrb[0].mxu0
      %v1499 = vadd.f32 %v1363, %v1498
      %v1500 = vpop.f32.mrb[0].mxu0
      %1501 = vmatprep.mubr.bf16.mxu0 0
      %1502 = vmatmul.mubr.bf16.gmra.mrb[0].mxu0 %v1411
      %v1503 = vpop.f32.mrb[0].mxu0
      %v1504 = vadd.f32 %v1363, %v1503
      %v1505 = vpop.f32.mrb[0].mxu0
      %v1506 = vpop.f32.mrb[0].mxu0
      %v1507 = vadd.f32 %v1363, %v1506
      %v1508 = vpop.f32.mrb[0].mxu0
      %1509 = vdwg.mxu0
      %v1510 = vtanh.pop %v1448
      %v1511 = vtanh.pop %v1451
      %v1512 = vtanh.pop %v1456
      %v1513 = vtanh.pop %v1459
      %v1514 = vtanh.pop %v1464
      %v1515 = vtanh.pop %v1467
      %v1516 = vtanh.pop %v1472
      %v1517 = vtanh.pop %v1475
      %v1518 = vtanh.pop %v1480
      %v1519 = vtanh.pop %v1483
      %v1520 = vtanh.pop %v1488
      %v1521 = vtanh.pop %v1491
      %v1522 = vtanh.pop %v1496
      %v1523 = vtanh.pop %v1499
      %v1524 = vtanh.pop %v1504
      %v1525 = vtanh.pop %v1507
      %1526 = vst [vmem:[%s388] sm:$0xff] %v1510
      %1527 = vst [vmem:[%s388 + $0x8] sm:$0xff] %v1511
      %1528 = vst [vmem:[%s388 + $0x10] sm:$0xff] %v1512
      %1529 = vst [vmem:[%s388 + $0x18] sm:$0xff] %v1513
      %1530 = vst [vmem:[%s388 + $0x20] sm:$0xff] %v1514
      %1531 = vst [vmem:[%s388 + $0x28] sm:$0xff] %v1515
      %1532 = vst [vmem:[%s388 + $0x30] sm:$0xff] %v1516
      %1533 = vst [vmem:[%s388 + $0x38] sm:$0xff] %v1517
      %1534 = vst [vmem:[%s388 + $0x40] sm:$0xff] %v1518
      %1535 = vst [vmem:[%s388 + $0x48] sm:$0xff] %v1519
      %1536 = vst [vmem:[%s388 + $0x50] sm:$0xff] %v1520
      %1537 = vst [vmem:[%s388 + $0x58] sm:$0xff] %v1521
      %1538 = vst [vmem:[%s388 + $0x60] sm:$0xff] %v1522
      %1539 = vst [vmem:[%s388 + $0x68] sm:$0xff] %v1523
      %1540 = vst [vmem:[%s388 + $0x70] sm:$0xff] %v1524
      %1541 = vst [vmem:[%s388 + $0x78] sm:$0xff] %v1525
      %s1542 = smul.u32 16, %s22
      %p1543 = scmp.lt.s32.totalorder %s1542, 31
      %s1544 = scalar_select %p1543, %s1542, 31
      %s1545 = smul.addr %s1544, 8
      %s1546 = scalar_lea.vmem %s11, %s1545
      // Predicated region
      $region65: #{threat_generator_forward.1} parent=63 // pred_check
        %p1547 = pneg %p276
      $region66: #{threat_generator_forward.1} parent=63 // pred_check_branch
        %1549 = sbr.rel (%p1547) target = $region68
      $region67: #{threat_generator_forward.1} parent=63 // pred_region
        %s1550 = smul.u32 16, %s22
      $region68: #{threat_generator_forward.1} parent=63 // pred_fallthru
        _
    $region64: #{threat_generator_forward.1} parent=5 // pred_fallthru
      _
    %p1551 = scmp.le.s32.totalorder 2, %s17
    // Predicated region
    $region69: #{threat_generator_forward.1} parent=5 // pred_check
      %p1552 = pneg %p1551
    $region70: #{threat_generator_forward.1} parent=5 // pred_check_branch
      %1554 = sbr.rel (%p1552) target = $region72
    $region71: #{threat_generator_forward.1} parent=5 // pred_region
      %s1555 = ssub.s32 %s17, 2
      // Predicated region
      $region73: #{threat_generator_forward.1} parent=71 // pred_check
        %p1556 = pneg %p282
      $region74: #{threat_generator_forward.1} parent=71 // pred_check_branch
        %1558 = sbr.rel (%p1556) target = $region76
      $region75: #{threat_generator_forward.1} parent=71 // pred_region
        %s1559 = smul.u32 16, %s23
        %p1560 = scmp.lt.s32.totalorder %s1559, 31
        %s1561 = scalar_select %p1560, %s1559, 31
        %s1562 = smul.addr %s1561, 8
        %s1563 = scalar_lea.vmem %s11, %s1562
      $region76: #{threat_generator_forward.1} parent=71 // pred_fallthru
        _
    $region72: #{threat_generator_forward.1} parent=5 // pred_fallthru
      _
  $region6: #{threat_generator_forward.1} parent=0 // loop_footer
    %s21 = sadd.s32 1, %s17
  $region7: #{threat_generator_forward.1} parent=0 // loop_footer_branch
    %16 = sbr.rel target = $region3
  $region8: #{threat_generator_forward.1} parent=0 // loop_exit
    _

</llo_original>
